<compile_context>
chip_gen: v6e
topology: v6e:2x2x1
jax: 0.10.0
libtpu: 0.0.40
codegen_flags: <defaults>
</compile_context>

<pallas_src>
import math

import jax
import jax.numpy as jnp
import numpy as np
from jax import lax
from jax.experimental import pallas as pl
from jax.experimental.pallas import tpu as pltpu


LANES = 128        # every Cout stored lane-padded to a full vreg -> unmasked vst
K_ALIGN = 128      # contraction dim padded to full 128-lane vregs (lane-dense LHS)
DEFAULT_TM = 512   # output-row tile over M = N*Ho*Wo


def _round_up(x, m):
    return (x + m - 1) // m * m


def _cdiv(a, b):
    return (a + b - 1) // b


# --------------------------------------------------------------------------- #
# Pallas kernel: stacked-K MXU matmul (im2col patches @ scale-folded weight)   #
#                + bias + ReLU epilogue                                        #
# --------------------------------------------------------------------------- #
def _mm_bias_relu_kernel(p_ref, w_ref, b_ref, o_ref):
    """p_ref: [TM, K]   bf16 im2col patch tile (K = 9*Cin_real, padded to 128k)
       w_ref: [K, 128]  bf16 packed conv weight with BN scale folded in
       b_ref: [1, 128]  f32 folded-BN bias (zeros in pad lanes)
       o_ref: [TM, 128] bf16 lane-dense output tile"""
    acc = jnp.dot(p_ref[...], w_ref[...], preferred_element_type=jnp.float32)
    o_ref[...] = jnp.maximum(acc + b_ref[...], 0.0).astype(o_ref.dtype)


def conv3x3_s2_bn_relu(x, w_packed, bias_p, *, tm=DEFAULT_TM):
    """Fused Conv2d(k=3, s=2, p=1) + BatchNorm(eval) + ReLU.

    x:        [N, H, W, Cin]  real channels only (no lane padding).
    w_packed: [K_pad, 128]    from pack_conv_bn_params (K = 9*Cin, scale folded).
    bias_p:   [1, 128]        folded-BN bias, zeros in pad lanes.
    returns:  [N, Ho, Wo, 128] bf16 with the real channels in the leading lanes.
    """
    n, h, wd, cin = x.shape
    k_pad = w_packed.shape[0]
    ho = (h + 2 - 3) // 2 + 1
    wo = (wd + 2 - 3) // 2 + 1

    # Wrapper glue (fused by XLA under jit): bf16 cast, pad, stride-2 tap
    # slices -> im2col patches with batch folded into the M axis.
    xb = x.astype(jnp.bfloat16)
    xp = jnp.pad(xb, ((0, 0), (1, 1), (1, 1), (0, 0)))
    chunks = []
    for kh in range(3):
        for kw in range(3):
            chunks.append(xp[:, kh:kh + 2 * ho - 1:2, kw:kw + 2 * wo - 1:2, :])
    patches = jnp.concatenate(chunks, axis=-1)              # (N, Ho, Wo, 9*Cin)
    m = n * ho * wo
    patches = patches.reshape(m, 9 * cin)                   # batch folded into M
    if k_pad > 9 * cin:                                      # pad contraction dim
        patches = jnp.pad(patches, ((0, 0), (0, k_pad - 9 * cin)))

    tm_eff = min(tm, _round_up(m, 8))
    if m > 256 and _cdiv(m, tm_eff) < 2:                     # keep >=2 tiles (v7x 2 TCs)
        tm_eff = _round_up(_cdiv(m, 2), 8)
    m_pad = _round_up(m, tm_eff)
    if m_pad > m:
        patches = jnp.pad(patches, ((0, m_pad - m), (0, 0)))

    out = pl.pallas_call(
        _mm_bias_relu_kernel,
        out_shape=jax.ShapeDtypeStruct((m_pad, LANES), jnp.bfloat16),
        grid_spec=pltpu.PrefetchScalarGridSpec(
            num_scalar_prefetch=0,
            grid=(m_pad // tm_eff,),
            in_specs=[
                pl.BlockSpec((tm_eff, k_pad), lambda i: (i, 0)),
                pl.BlockSpec((k_pad, LANES), lambda i: (0, 0)),
                pl.BlockSpec((1, LANES), lambda i: (0, 0)),
            ],
            out_specs=pl.BlockSpec((tm_eff, LANES), lambda i: (i, 0)),
        ),
        compiler_params=pltpu.CompilerParams(
            dimension_semantics=("parallel",)),
    )(patches, w_packed, bias_p)

    # NOTE: padded M rows hold ReLU(bias), not zeros; they are sliced off here.
    return out[:m].reshape(n, ho, wo, LANES)


# --------------------------------------------------------------------------- #
# Parameter construction / packing                                             #
# --------------------------------------------------------------------------- #
def make_conv_bn_params(key, cin, cout):
    k1, k2, k3, k4, k5 = jax.random.split(key, 5)
    w = jax.random.normal(k1, (3, 3, cin, cout), jnp.float32) / math.sqrt(9 * cin)
    gamma = 1.0 + 0.1 * jax.random.normal(k2, (cout,), jnp.float32)
    beta = 0.1 * jax.random.normal(k3, (cout,), jnp.float32)
    mean = 0.05 * jax.random.normal(k4, (cout,), jnp.float32)
    var = 1.0 + 0.1 * jnp.abs(jax.random.normal(k5, (cout,), jnp.float32))
    eps = 1e-5
    scale = gamma / jnp.sqrt(var + eps)
    bias = beta - mean * scale
    return w, scale, bias


def pack_conv_bn_params(w, scale, bias):
    """Fold BN scale into the (3,3,Cin,Cout) conv weight (in f32), pack into one
    dense (K_pad, 128) bf16 tile (row order = (kh, kw, ci), K = 9*Cin real
    channels padded to a multiple of 128), plus a (1, 128) f32 bias with zeros
    in the pad lanes."""
    _, _, cin, cout = w.shape
    assert cout <= LANES
    w_folded = w * scale.reshape(1, 1, 1, cout)              # fold BN scale in f32
    wp = jnp.zeros((3, 3, cin, LANES), jnp.float32)
    wp = wp.at[:, :, :, :cout].set(w_folded)
    wp = wp.reshape(9 * cin, LANES)
    k_pad = _round_up(9 * cin, K_ALIGN)
    if k_pad > 9 * cin:
        wp = jnp.pad(wp, ((0, k_pad - 9 * cin), (0, 0)))
    bp = jnp.zeros((1, LANES), jnp.float32).at[0, :cout].set(bias)
    return wp.astype(jnp.bfloat16), bp


# --------------------------------------------------------------------------- #
# Module: synthetic backbone (4 stride-2 stages) + spatial_shrink              #
# --------------------------------------------------------------------------- #
DEPTH_CHANNELS = [8, 16, 32, 64]   # stand-in for self.model.depth_channels


def init_module_params(key, in_channels):
    keys = jax.random.split(key, len(DEPTH_CHANNELS) + 1)
    raw = {"backbone": [], "spatial_shrink": None}
    cin = in_channels
    for i, cout in enumerate(DEPTH_CHANNELS):
        raw["backbone"].append(make_conv_bn_params(keys[i], cin, cout))
        cin = cout
    raw["spatial_shrink"] = make_conv_bn_params(
        keys[-1], DEPTH_CHANNELS[-1], DEPTH_CHANNELS[-1])
    return raw


def pack_module_params(raw):
    return {
        "backbone": [pack_conv_bn_params(*p) for p in raw["backbone"]],
        "spatial_shrink": pack_conv_bn_params(*raw["spatial_shrink"]),
    }


@jax.jit
def forward(x_nchw, packed):
    """Mirrors SimpleCreateAdditionalFeatureMapBackbone.forward (NCHW in/out)."""
    x = jnp.transpose(x_nchw, (0, 2, 3, 1))                 # NCHW -> NHWC once
    feats = []
    cur = x
    for (wp, bp), cout in zip(packed["backbone"], DEPTH_CHANNELS):
        y = conv3x3_s2_bn_relu(cur, wp, bp)                  # (N,Ho,Wo,128) bf16
        feats.append(y)
        cur = y[..., :cout]                                  # real channels only for next K
    wp, bp = packed["spatial_shrink"]
    last_map = conv3x3_s2_bn_relu(cur, wp, bp)

    chans = [DEPTH_CHANNELS[0], DEPTH_CHANNELS[1], DEPTH_CHANNELS[2], DEPTH_CHANNELS[-1]]
    outs = [feats[0], feats[1], feats[2], last_map]
    # strip lane padding + back to NCHW f32 (module interface)
    return [jnp.transpose(o[..., :c], (0, 3, 1, 2)).astype(jnp.float32)
            for o, c in zip(outs, chans)]


# --------------------------------------------------------------------------- #
# Pure-JAX references (sanity checks) with the SAME rounding points            #
# --------------------------------------------------------------------------- #
def _rnd(a):
    return a.astype(jnp.bfloat16).astype(jnp.float32)


def conv_bias_relu_ref(x_nhwc, w_folded, bias):
    y = lax.conv_general_dilated(
        x_nhwc, w_folded, window_strides=(2, 2), padding=((1, 1), (1, 1)),
        dimension_numbers=("NHWC", "HWIO", "NHWC"))
    return jnp.maximum(y + bias.reshape(1, 1, 1, -1), 0.0)


def forward_ref(x_nchw, raw):
    x = jnp.transpose(x_nchw, (0, 2, 3, 1))
    feats = []
    cur = x
    for (w, s, b) in raw["backbone"]:
        wf = _rnd(w * s.reshape(1, 1, 1, -1))                # fold scale, bf16 round
        cur = _rnd(conv_bias_relu_ref(_rnd(cur), wf, b))     # bf16-round output
        feats.append(cur)
    w, s, b = raw["spatial_shrink"]
    wf = _rnd(w * s.reshape(1, 1, 1, -1))
    last = _rnd(conv_bias_relu_ref(_rnd(feats[-1]), wf, b))
    outs = [feats[0], feats[1], feats[2], last]
    return [jnp.transpose(o, (0, 3, 1, 2)) for o in outs]


def _check_conv_block(key, n, h, w, cin, cout):
    """Check the fused Pallas block against lax.conv with identical bf16
    rounding points (inputs, scale-folded weight, and output)."""
    kx, kp = jax.random.split(key)
    x = jax.random.normal(kx, (n, h, w, cin), jnp.float32)
    wt, sc, bi = make_conv_bn_params(kp, cin, cout)
    wp, bp = pack_conv_bn_params(wt, sc, bi)
    got = conv3x3_s2_bn_relu(x.astype(jnp.bfloat16), wp, bp)
    got = np.asarray(got[..., :cout].astype(jnp.float32))
    wf = _rnd(wt * sc.reshape(1, 1, 1, -1))
    ref = np.asarray(_rnd(conv_bias_relu_ref(_rnd(x), wf, bi)))
    np.testing.assert_allclose(got, ref, rtol=2e-2, atol=2e-2)


if __name__ == "__main__":
    key = jax.random.PRNGKey(0)
    k_x, k_p, k_t = jax.random.split(key, 3)

    N, C, H, W = 2, 3, 64, 64                       # PyTorch-style NCHW input
    x = jax.random.normal(k_x, (N, C, H, W), jnp.float32)
    raw_params = init_module_params(k_p, C)
    packed_params = pack_module_params(raw_params)

    outs = forward(x, packed_params)
    outs = [jax.block_until_ready(o) for o in outs]

    # Expected multi-scale shapes: backbone stages at /2,/4,/8 + spatial_shrink at /32
    expected = [
        (N, DEPTH_CHANNELS[0], H // 2, W // 2),
        (N, DEPTH_CHANNELS[1], H // 4, W // 4),
        (N, DEPTH_CHANNELS[2], H // 8, W // 8),
        (N, DEPTH_CHANNELS[3], H // 32, W // 32),
    ]
    for o, e in zip(outs, expected):
        assert o.shape == e, (o.shape, e)
        assert bool(jnp.all(jnp.isfinite(o)))

    # End-to-end numerics vs. a bf16-rounded pure-JAX reference of the same net.
    refs = forward_ref(x, raw_params)
    for o, r in zip(outs, refs):
        np.testing.assert_allclose(np.asarray(o), np.asarray(r), rtol=5e-2, atol=5e-2)

    # Per-block checks: stage-1-like (3-ch input, K=27->128) and a mid-stage-like
    # (real-channel contraction, K=144->256) path.
    _check_conv_block(jax.random.fold_in(k_t, 0), 2, 16, 16, cin=3, cout=8)
    _check_conv_block(jax.random.fold_in(k_t, 1), 2, 8, 8, cin=16, cout=32)

    print("KERNEL_OK")
</pallas_src>

<mosaic_0001>
module attributes {stable_mosaic.version = 11 : i64} {
  func.func @_mm_bias_relu_kernel(%arg0: i32, %arg1: memref<512x128xbf16, #tpu.memory_space<vmem>>, %arg2: memref<128x128xbf16, #tpu.memory_space<vmem>>, %arg3: memref<1x128xf32, #tpu.memory_space<vmem>>, %arg4: memref<512x128xbf16, #tpu.memory_space<vmem>>) attributes {dimension_semantics = [#tpu.dimension_semantics<parallel>], iteration_bounds = array<i64: 4>, scalar_prefetch = 0 : i64, scratch_operands = 0 : i64, tpu.core_type = #tpu.core_type<tc>, window_params = [{transform_indices = @transform_0, window_bounds = array<i64: 512, 128>}, {pipeline_mode = #tpu.pipeline_mode<synchronous>, transform_indices = @transform_1, window_bounds = array<i64: 128, 128>}, {pipeline_mode = #tpu.pipeline_mode<synchronous>, transform_indices = @transform_2, window_bounds = array<i64: 1, 128>}, {transform_indices = @transform_3, window_bounds = array<i64: 512, 128>}]} {
    %c0 = arith.constant 0 : index
    %c0_0 = arith.constant 0 : index
    %0 = vector.load %arg1[%c0, %c0_0] : memref<512x128xbf16, #tpu.memory_space<vmem>>, vector<512x128xbf16>
    %c0_1 = arith.constant 0 : index
    %c0_2 = arith.constant 0 : index
    %1 = vector.load %arg2[%c0_1, %c0_2] : memref<128x128xbf16, #tpu.memory_space<vmem>>, vector<128x128xbf16>
    %cst = arith.constant dense<0.000000e+00> : vector<512x128xf32>
    %2 = tpu.matmul %0, %1, %cst {dimension_numbers = #tpu.dot_dimension_numbers<[1], [0], [0], [1], [0, 0, 1, 1], [], []>} : vector<512x128xbf16>, vector<128x128xbf16>, vector<512x128xf32> -> vector<512x128xf32>
    %c0_3 = arith.constant 0 : index
    %c0_4 = arith.constant 0 : index
    %3 = vector.load %arg3[%c0_3, %c0_4] : memref<1x128xf32, #tpu.memory_space<vmem>>, vector<1x128xf32>
    %4 = vector.broadcast %3 : vector<1x128xf32> to vector<512x128xf32>
    %5 = arith.addf %2, %4 : vector<512x128xf32>
    %cst_5 = arith.constant 0.000000e+00 : f32
    %6 = vector.broadcast %cst_5 : f32 to vector<512x128xf32>
    %7 = arith.maximumf %5, %6 : vector<512x128xf32>
    %8 = arith.truncf %7 : vector<512x128xf32> to vector<512x128xbf16>
    %c0_6 = arith.constant 0 : index
    %c0_7 = arith.constant 0 : index
    %9 = vector.load %arg4[%c0_6, %c0_7] : memref<512x128xbf16, #tpu.memory_space<vmem>>, vector<512x128xbf16>
    tpu.vector_store %arg4[%c0_6, %c0_7], %8 {strides = array<i32>} : memref<512x128xbf16, #tpu.memory_space<vmem>>, vector<512x128xbf16>,
    return
  }
  func.func @transform_0(%arg0: i32) -> (i32, i32) {
    %c0_i32 = arith.constant 0 : i32
    %c0_i32_0 = arith.constant 0 : i32
    return %arg0, %c0_i32 : i32, i32
  }
  func.func @transform_1(%arg0: i32) -> (i32, i32) {
    %c0_i32 = arith.constant 0 : i32
    %c0_i32_0 = arith.constant 0 : i32
    %c0_i32_1 = arith.constant 0 : i32
    return %c0_i32, %c0_i32_0 : i32, i32
  }
  func.func @transform_2(%arg0: i32) -> (i32, i32) {
    %c0_i32 = arith.constant 0 : i32
    %c0_i32_0 = arith.constant 0 : i32
    %c0_i32_1 = arith.constant 0 : i32
    return %c0_i32, %c0_i32_0 : i32, i32
  }
  func.func @transform_3(%arg0: i32) -> (i32, i32) {
    %c0_i32 = arith.constant 0 : i32
    %c0_i32_0 = arith.constant 0 : i32
    return %arg0, %c0_i32 : i32, i32
  }
}

module attributes {stable_mosaic.version = 11 : i64} {
  func.func @_mm_bias_relu_kernel(%arg0: i32, %arg1: memref<256x128xbf16, #tpu.memory_space<vmem>>, %arg2: memref<128x128xbf16, #tpu.memory_space<vmem>>, %arg3: memref<1x128xf32, #tpu.memory_space<vmem>>, %arg4: memref<256x128xbf16, #tpu.memory_space<vmem>>) attributes {dimension_semantics = [#tpu.dimension_semantics<parallel>], iteration_bounds = array<i64: 2>, scalar_prefetch = 0 : i64, scratch_operands = 0 : i64, tpu.core_type = #tpu.core_type<tc>, window_params = [{transform_indices = @transform_0, window_bounds = array<i64: 256, 128>}, {pipeline_mode = #tpu.pipeline_mode<synchronous>, transform_indices = @transform_1, window_bounds = array<i64: 128, 128>}, {pipeline_mode = #tpu.pipeline_mode<synchronous>, transform_indices = @transform_2, window_bounds = array<i64: 1, 128>}, {transform_indices = @transform_3, window_bounds = array<i64: 256, 128>}]} {
    %c0 = arith.constant 0 : index
    %c0_0 = arith.constant 0 : index
    %0 = vector.load %arg1[%c0, %c0_0] : memref<256x128xbf16, #tpu.memory_space<vmem>>, vector<256x128xbf16>
    %c0_1 = arith.constant 0 : index
    %c0_2 = arith.constant 0 : index
    %1 = vector.load %arg2[%c0_1, %c0_2] : memref<128x128xbf16, #tpu.memory_space<vmem>>, vector<128x128xbf16>
    %cst = arith.constant dense<0.000000e+00> : vector<256x128xf32>
    %2 = tpu.matmul %0, %1, %cst {dimension_numbers = #tpu.dot_dimension_numbers<[1], [0], [0], [1], [0, 0, 1, 1], [], []>} : vector<256x128xbf16>, vector<128x128xbf16>, vector<256x128xf32> -> vector<256x128xf32>
    %c0_3 = arith.constant 0 : index
    %c0_4 = arith.constant 0 : index
    %3 = vector.load %arg3[%c0_3, %c0_4] : memref<1x128xf32, #tpu.memory_space<vmem>>, vector<1x128xf32>
    %4 = vector.broadcast %3 : vector<1x128xf32> to vector<256x128xf32>
    %5 = arith.addf %2, %4 : vector<256x128xf32>
    %cst_5 = arith.constant 0.000000e+00 : f32
    %6 = vector.broadcast %cst_5 : f32 to vector<256x128xf32>
    %7 = arith.maximumf %5, %6 : vector<256x128xf32>
    %8 = arith.truncf %7 : vector<256x128xf32> to vector<256x128xbf16>
    %c0_6 = arith.constant 0 : index
    %c0_7 = arith.constant 0 : index
    %9 = vector.load %arg4[%c0_6, %c0_7] : memref<256x128xbf16, #tpu.memory_space<vmem>>, vector<256x128xbf16>
    tpu.vector_store %arg4[%c0_6, %c0_7], %8 {strides = array<i32>} : memref<256x128xbf16, #tpu.memory_space<vmem>>, vector<256x128xbf16>,
    return
  }
  func.func @transform_0(%arg0: i32) -> (i32, i32) {
    %c0_i32 = arith.constant 0 : i32
    %c0_i32_0 = arith.constant 0 : i32
    return %arg0, %c0_i32 : i32, i32
  }
  func.func @transform_1(%arg0: i32) -> (i32, i32) {
    %c0_i32 = arith.constant 0 : i32
    %c0_i32_0 = arith.constant 0 : i32
    %c0_i32_1 = arith.constant 0 : i32
    return %c0_i32, %c0_i32_0 : i32, i32
  }
  func.func @transform_2(%arg0: i32) -> (i32, i32) {
    %c0_i32 = arith.constant 0 : i32
    %c0_i32_0 = arith.constant 0 : i32
    %c0_i32_1 = arith.constant 0 : i32
    return %c0_i32, %c0_i32_0 : i32, i32
  }
  func.func @transform_3(%arg0: i32) -> (i32, i32) {
    %c0_i32 = arith.constant 0 : i32
    %c0_i32_0 = arith.constant 0 : i32
    return %arg0, %c0_i32 : i32, i32
  }
}

module attributes {stable_mosaic.version = 11 : i64} {
  func.func @_mm_bias_relu_kernel(%arg0: i32, %arg1: memref<128x256xbf16, #tpu.memory_space<vmem>>, %arg2: memref<256x128xbf16, #tpu.memory_space<vmem>>, %arg3: memref<1x128xf32, #tpu.memory_space<vmem>>, %arg4: memref<128x128xbf16, #tpu.memory_space<vmem>>) attributes {dimension_semantics = [#tpu.dimension_semantics<parallel>], iteration_bounds = array<i64: 1>, scalar_prefetch = 0 : i64, scratch_operands = 0 : i64, tpu.core_type = #tpu.core_type<tc>, window_params = [{transform_indices = @transform_0, window_bounds = array<i64: 128, 256>}, {pipeline_mode = #tpu.pipeline_mode<synchronous>, transform_indices = @transform_1, window_bounds = array<i64: 256, 128>}, {pipeline_mode = #tpu.pipeline_mode<synchronous>, transform_indices = @transform_2, window_bounds = array<i64: 1, 128>}, {transform_indices = @transform_3, window_bounds = array<i64: 128, 128>}]} {
    %c0 = arith.constant 0 : index
    %c0_0 = arith.constant 0 : index
    %0 = vector.load %arg1[%c0, %c0_0] : memref<128x256xbf16, #tpu.memory_space<vmem>>, vector<128x256xbf16>
    %c0_1 = arith.constant 0 : index
    %c0_2 = arith.constant 0 : index
    %1 = vector.load %arg2[%c0_1, %c0_2] : memref<256x128xbf16, #tpu.memory_space<vmem>>, vector<256x128xbf16>
    %cst = arith.constant dense<0.000000e+00> : vector<128x128xf32>
    %2 = tpu.matmul %0, %1, %cst {dimension_numbers = #tpu.dot_dimension_numbers<[1], [0], [0], [1], [0, 0, 1, 1], [], []>} : vector<128x256xbf16>, vector<256x128xbf16>, vector<128x128xf32> -> vector<128x128xf32>
    %c0_3 = arith.constant 0 : index
    %c0_4 = arith.constant 0 : index
    %3 = vector.load %arg3[%c0_3, %c0_4] : memref<1x128xf32, #tpu.memory_space<vmem>>, vector<1x128xf32>
    %4 = vector.broadcast %3 : vector<1x128xf32> to vector<128x128xf32>
    %5 = arith.addf %2, %4 : vector<128x128xf32>
    %cst_5 = arith.constant 0.000000e+00 : f32
    %6 = vector.broadcast %cst_5 : f32 to vector<128x128xf32>
    %7 = arith.maximumf %5, %6 : vector<128x128xf32>
    %8 = arith.truncf %7 : vector<128x128xf32> to vector<128x128xbf16>
    %c0_6 = arith.constant 0 : index
    %c0_7 = arith.constant 0 : index
    %9 = vector.load %arg4[%c0_6, %c0_7] : memref<128x128xbf16, #tpu.memory_space<vmem>>, vector<128x128xbf16>
    tpu.vector_store %arg4[%c0_6, %c0_7], %8 {strides = array<i32>} : memref<128x128xbf16, #tpu.memory_space<vmem>>, vector<128x128xbf16>,
    return
  }
  func.func @transform_0(%arg0: i32) -> (i32, i32) {
    %c0_i32 = arith.constant 0 : i32
    %c0_i32_0 = arith.constant 0 : i32
    return %arg0, %c0_i32 : i32, i32
  }
  func.func @transform_1(%arg0: i32) -> (i32, i32) {
    %c0_i32 = arith.constant 0 : i32
    %c0_i32_0 = arith.constant 0 : i32
    %c0_i32_1 = arith.constant 0 : i32
    return %c0_i32, %c0_i32_0 : i32, i32
  }
  func.func @transform_2(%arg0: i32) -> (i32, i32) {
    %c0_i32 = arith.constant 0 : i32
    %c0_i32_0 = arith.constant 0 : i32
    %c0_i32_1 = arith.constant 0 : i32
    return %c0_i32, %c0_i32_0 : i32, i32
  }
  func.func @transform_3(%arg0: i32) -> (i32, i32) {
    %c0_i32 = arith.constant 0 : i32
    %c0_i32_0 = arith.constant 0 : i32
    return %arg0, %c0_i32 : i32, i32
  }
}

module attributes {stable_mosaic.version = 11 : i64} {
  func.func @_mm_bias_relu_kernel(%arg0: i32, %arg1: memref<32x384xbf16, #tpu.memory_space<vmem>>, %arg2: memref<384x128xbf16, #tpu.memory_space<vmem>>, %arg3: memref<1x128xf32, #tpu.memory_space<vmem>>, %arg4: memref<32x128xbf16, #tpu.memory_space<vmem>>) attributes {dimension_semantics = [#tpu.dimension_semantics<parallel>], iteration_bounds = array<i64: 1>, scalar_prefetch = 0 : i64, scratch_operands = 0 : i64, tpu.core_type = #tpu.core_type<tc>, window_params = [{transform_indices = @transform_0, window_bounds = array<i64: 32, 384>}, {pipeline_mode = #tpu.pipeline_mode<synchronous>, transform_indices = @transform_1, window_bounds = array<i64: 384, 128>}, {pipeline_mode = #tpu.pipeline_mode<synchronous>, transform_indices = @transform_2, window_bounds = array<i64: 1, 128>}, {transform_indices = @transform_3, window_bounds = array<i64: 32, 128>}]} {
    %c0 = arith.constant 0 : index
    %c0_0 = arith.constant 0 : index
    %0 = vector.load %arg1[%c0, %c0_0] : memref<32x384xbf16, #tpu.memory_space<vmem>>, vector<32x384xbf16>
    %c0_1 = arith.constant 0 : index
    %c0_2 = arith.constant 0 : index
    %1 = vector.load %arg2[%c0_1, %c0_2] : memref<384x128xbf16, #tpu.memory_space<vmem>>, vector<384x128xbf16>
    %cst = arith.constant dense<0.000000e+00> : vector<32x128xf32>
    %2 = tpu.matmul %0, %1, %cst {dimension_numbers = #tpu.dot_dimension_numbers<[1], [0], [0], [1], [0, 0, 1, 1], [], []>} : vector<32x384xbf16>, vector<384x128xbf16>, vector<32x128xf32> -> vector<32x128xf32>
    %c0_3 = arith.constant 0 : index
    %c0_4 = arith.constant 0 : index
    %3 = vector.load %arg3[%c0_3, %c0_4] : memref<1x128xf32, #tpu.memory_space<vmem>>, vector<1x128xf32>
    %4 = vector.broadcast %3 : vector<1x128xf32> to vector<32x128xf32>
    %5 = arith.addf %2, %4 : vector<32x128xf32>
    %cst_5 = arith.constant 0.000000e+00 : f32
    %6 = vector.broadcast %cst_5 : f32 to vector<32x128xf32>
    %7 = arith.maximumf %5, %6 : vector<32x128xf32>
    %8 = arith.truncf %7 : vector<32x128xf32> to vector<32x128xbf16>
    %c0_6 = arith.constant 0 : index
    %c0_7 = arith.constant 0 : index
    %9 = vector.load %arg4[%c0_6, %c0_7] : memref<32x128xbf16, #tpu.memory_space<vmem>>, vector<32x128xbf16>
    tpu.vector_store %arg4[%c0_6, %c0_7], %8 {strides = array<i32>} : memref<32x128xbf16, #tpu.memory_space<vmem>>, vector<32x128xbf16>,
    return
  }
  func.func @transform_0(%arg0: i32) -> (i32, i32) {
    %c0_i32 = arith.constant 0 : i32
    %c0_i32_0 = arith.constant 0 : i32
    return %arg0, %c0_i32 : i32, i32
  }
  func.func @transform_1(%arg0: i32) -> (i32, i32) {
    %c0_i32 = arith.constant 0 : i32
    %c0_i32_0 = arith.constant 0 : i32
    %c0_i32_1 = arith.constant 0 : i32
    return %c0_i32, %c0_i32_0 : i32, i32
  }
  func.func @transform_2(%arg0: i32) -> (i32, i32) {
    %c0_i32 = arith.constant 0 : i32
    %c0_i32_0 = arith.constant 0 : i32
    %c0_i32_1 = arith.constant 0 : i32
    return %c0_i32, %c0_i32_0 : i32, i32
  }
  func.func @transform_3(%arg0: i32) -> (i32, i32) {
    %c0_i32 = arith.constant 0 : i32
    %c0_i32_0 = arith.constant 0 : i32
    return %arg0, %c0_i32 : i32, i32
  }
}

module attributes {stable_mosaic.version = 11 : i64} {
  func.func @_mm_bias_relu_kernel(%arg0: i32, %arg1: memref<8x640xbf16, #tpu.memory_space<vmem>>, %arg2: memref<640x128xbf16, #tpu.memory_space<vmem>>, %arg3: memref<1x128xf32, #tpu.memory_space<vmem>>, %arg4: memref<8x128xbf16, #tpu.memory_space<vmem>>) attributes {dimension_semantics = [#tpu.dimension_semantics<parallel>], iteration_bounds = array<i64: 1>, scalar_prefetch = 0 : i64, scratch_operands = 0 : i64, tpu.core_type = #tpu.core_type<tc>, window_params = [{transform_indices = @transform_0, window_bounds = array<i64: 8, 640>}, {pipeline_mode = #tpu.pipeline_mode<synchronous>, transform_indices = @transform_1, window_bounds = array<i64: 640, 128>}, {pipeline_mode = #tpu.pipeline_mode<synchronous>, transform_indices = @transform_2, window_bounds = array<i64: 1, 128>}, {transform_indices = @transform_3, window_bounds = array<i64: 8, 128>}]} {
    %c0 = arith.constant 0 : index
    %c0_0 = arith.constant 0 : index
    %0 = vector.load %arg1[%c0, %c0_0] : memref<8x640xbf16, #tpu.memory_space<vmem>>, vector<8x640xbf16>
    %c0_1 = arith.constant 0 : index
    %c0_2 = arith.constant 0 : index
    %1 = vector.load %arg2[%c0_1, %c0_2] : memref<640x128xbf16, #tpu.memory_space<vmem>>, vector<640x128xbf16>
    %cst = arith.constant dense<0.000000e+00> : vector<8x128xf32>
    %2 = tpu.matmul %0, %1, %cst {dimension_numbers = #tpu.dot_dimension_numbers<[1], [0], [0], [1], [0, 0, 1, 1], [], []>} : vector<8x640xbf16>, vector<640x128xbf16>, vector<8x128xf32> -> vector<8x128xf32>
    %c0_3 = arith.constant 0 : index
    %c0_4 = arith.constant 0 : index
    %3 = vector.load %arg3[%c0_3, %c0_4] : memref<1x128xf32, #tpu.memory_space<vmem>>, vector<1x128xf32>
    %4 = vector.broadcast %3 : vector<1x128xf32> to vector<8x128xf32>
    %5 = arith.addf %2, %4 : vector<8x128xf32>
    %cst_5 = arith.constant 0.000000e+00 : f32
    %6 = vector.broadcast %cst_5 : f32 to vector<8x128xf32>
    %7 = arith.maximumf %5, %6 : vector<8x128xf32>
    %8 = arith.truncf %7 : vector<8x128xf32> to vector<8x128xbf16>
    %c0_6 = arith.constant 0 : index
    %c0_7 = arith.constant 0 : index
    %9 = vector.load %arg4[%c0_6, %c0_7] : memref<8x128xbf16, #tpu.memory_space<vmem>>, vector<8x128xbf16>
    tpu.vector_store %arg4[%c0_6, %c0_7], %8 {strides = array<i32>} : memref<8x128xbf16, #tpu.memory_space<vmem>>, vector<8x128xbf16>,
    return
  }
  func.func @transform_0(%arg0: i32) -> (i32, i32) {
    %c0_i32 = arith.constant 0 : i32
    %c0_i32_0 = arith.constant 0 : i32
    return %arg0, %c0_i32 : i32, i32
  }
  func.func @transform_1(%arg0: i32) -> (i32, i32) {
    %c0_i32 = arith.constant 0 : i32
    %c0_i32_0 = arith.constant 0 : i32
    %c0_i32_1 = arith.constant 0 : i32
    return %c0_i32, %c0_i32_0 : i32, i32
  }
  func.func @transform_2(%arg0: i32) -> (i32, i32) {
    %c0_i32 = arith.constant 0 : i32
    %c0_i32_0 = arith.constant 0 : i32
    %c0_i32_1 = arith.constant 0 : i32
    return %c0_i32, %c0_i32_0 : i32, i32
  }
  func.func @transform_3(%arg0: i32) -> (i32, i32) {
    %c0_i32 = arith.constant 0 : i32
    %c0_i32_0 = arith.constant 0 : i32
    return %arg0, %c0_i32 : i32, i32
  }
}

</mosaic_0001>

<llo_original>
// kernel: forward.5
$region0: #{forward.5}
  #allocation0 [shape = 'u32[]', space=smem, size = 0x4, offset = 0x4, fixed_abs, tag = 'smem constant byte address 0x4 - core index']
  #allocation1 [shape = 'u32[144,128]{1,0:T(1,128)}', space=vmem, size = 0x12000, scoped, tag = 'internal scratch']
  %s0 = inlined_call_operand.vmem [shape: bf16[2048,128], index: 0, kind: input, shape index: {}]
  %s1 = inlined_call_operand.vmem [shape: bf16[128,128], index: 1, kind: input, shape index: {}]
  %s2 = inlined_call_operand.vmem [shape: f32[1,128], index: 2, kind: input, shape index: {}]
  %s3 = inlined_call_operand.vmem [shape: bf16[2048,128], index: 3, kind: output, shape index: {}]
  %s4 = sld [smem:[#allocation0]]
  $region45: #{forward.5} parent=0
    _
  %s6 = ssub.s32 1, %s4
  %s7 = scalar_select 0, %s6, %s4
  loop: start=0, step=1, limit=6
  $region2: #{forward.5} parent=0 // loop_pre_header
    _
  $region3: #{forward.5} parent=0 // loop_header
    %s9 = sphi 0, %s13
    %p10 = scmp.ge.s32.totalorder %s9, 6
    %s19 = sphi 0, %s21
    %s22 = sphi 0, %s19
    %s23 = sphi 0, %s22
    %s39 = sphi 0, %s23
    %s43 = sphi 0, %s43
    %s45 = sphi 0, %s43
    %s46 = sphi 0, %s45
    %s60 = sphi 0, %s46
    %s64 = sphi 0, %s64
    %s66 = sphi 0, %s64
    %s67 = sphi 0, %s66
    %s81 = sphi 0, %s67
    %s87 = sphi 0, %s89
    %s90 = sphi 0, %s87
    %s91 = sphi 0, %s90
    %s107 = sphi 0, %s91
  $region4: #{forward.5} parent=0 // loop_header_branch
    %12 = sbr.rel (%p10) target = $region8
  $region5: #{forward.5} parent=0 // loop_body
    %s14 = ssub.s32 %s9, 1
    %s15 = ssub.s32 %s9, 2
    %s16 = sadd.s32 %s9, 1
    %s17 = ssub.s32 %s9, %s16
    %p18 = scmp.eq.s32.totalorder %s17, 0
    %s20 = sadd.s32 %s19, 1
    %s21 = scalar_select %p18, %s19, %s20
    %p24 = pneg %p18
    %p25 = scmp.eq.s32.totalorder %s9, 3
    %p26 = por %p24, %p25
    %p27 = scmp.ne.s32.totalorder %s19, %s22
    %p28 = scmp.eq.s32.totalorder %s9, 0
    %p29 = por %p27, %p28
    %p30 = scmp.ne.s32.totalorder %s19, %s22
    %p31 = scmp.eq.s32.totalorder %s14, 3
    %p32 = por %p30, %p31
    %p33 = scmp.ne.s32.totalorder %s22, %s23
    %p34 = scmp.eq.s32.totalorder %s14, 0
    %p35 = por %p33, %p34
    %p36 = scmp.ne.s32.totalorder %s22, %s23
    %p37 = scmp.eq.s32.totalorder %s15, 3
    %p38 = por %p36, %p37
    %p40 = scmp.ne.s32.totalorder %s23, %s39
    %p41 = scmp.eq.s32.totalorder %s15, 0
    %p42 = por %p40, %p41
    %s44 = sadd.s32 %s43, 1
    %p47 = scmp.eq.s32.totalorder %s9, 3
    %p48 = scmp.ne.s32.totalorder %s43, %s45
    %p49 = scmp.eq.s32.totalorder %s9, 0
    %p50 = por %p48, %p49
    %p51 = scmp.ne.s32.totalorder %s43, %s45
    %p52 = scmp.eq.s32.totalorder %s14, 3
    %p53 = por %p51, %p52
    %p54 = scmp.ne.s32.totalorder %s45, %s46
    %p55 = scmp.eq.s32.totalorder %s14, 0
    %p56 = por %p54, %p55
    %p57 = scmp.ne.s32.totalorder %s45, %s46
    %p58 = scmp.eq.s32.totalorder %s15, 3
    %p59 = por %p57, %p58
    %p61 = scmp.ne.s32.totalorder %s46, %s60
    %p62 = scmp.eq.s32.totalorder %s15, 0
    %p63 = por %p61, %p62
    %s65 = sadd.s32 %s64, 1
    %p68 = scmp.eq.s32.totalorder %s9, 3
    %p69 = scmp.ne.s32.totalorder %s64, %s66
    %p70 = scmp.eq.s32.totalorder %s9, 0
    %p71 = por %p69, %p70
    %p72 = scmp.ne.s32.totalorder %s64, %s66
    %p73 = scmp.eq.s32.totalorder %s14, 3
    %p74 = por %p72, %p73
    %p75 = scmp.ne.s32.totalorder %s66, %s67
    %p76 = scmp.eq.s32.totalorder %s14, 0
    %p77 = por %p75, %p76
    %p78 = scmp.ne.s32.totalorder %s66, %s67
    %p79 = scmp.eq.s32.totalorder %s15, 3
    %p80 = por %p78, %p79
    %p82 = scmp.ne.s32.totalorder %s67, %s81
    %p83 = scmp.eq.s32.totalorder %s15, 0
    %p84 = por %p82, %p83
    %s85 = ssub.s32 %s9, %s16
    %p86 = scmp.eq.s32.totalorder %s85, 0
    %s88 = sadd.s32 %s87, 1
    %s89 = scalar_select %p86, %s87, %s88
    %p92 = pneg %p86
    %p93 = scmp.eq.s32.totalorder %s9, 3
    %p94 = por %p92, %p93
    %p95 = scmp.ne.s32.totalorder %s87, %s90
    %p96 = scmp.eq.s32.totalorder %s9, 0
    %p97 = por %p95, %p96
    %p98 = scmp.ne.s32.totalorder %s87, %s90
    %p99 = scmp.eq.s32.totalorder %s14, 3
    %p100 = por %p98, %p99
    %p101 = scmp.ne.s32.totalorder %s90, %s91
    %p102 = scmp.eq.s32.totalorder %s14, 0
    %p103 = por %p101, %p102
    %p104 = scmp.ne.s32.totalorder %s90, %s91
    %p105 = scmp.eq.s32.totalorder %s15, 3
    %p106 = por %p104, %p105
    %p108 = scmp.ne.s32.totalorder %s91, %s107
    %p109 = scmp.eq.s32.totalorder %s15, 0
    %p110 = por %p108, %p109
    %p111 = scmp.le.s32.totalorder 1, %s9
    %p112 = scmp.lt.s32.totalorder %s9, 5
    %p113 = pnand %p111, %p112
    %p114 = pneg %p113
    // Predicated region
    $region9: #{forward.5} parent=5 // pred_check
      _
    $region10: #{forward.5} parent=5 // pred_check_branch
      %116 = sbr.rel (%p113) target = $region12
    $region11: #{forward.5} parent=5 // pred_region
      %s117 = ssub.s32 %s9, 1
      // Predicated region
      $region13: #{forward.5} parent=11 // pred_check
        %p118 = pneg %p56
      $region14: #{forward.5} parent=11 // pred_check_branch
        %120 = sbr.rel (%p118) target = $region16
      $region15: #{forward.5} parent=11 // pred_region
        _
      $region16: #{forward.5} parent=11 // pred_fallthru
        _
      // Predicated region
      $region17: #{forward.5} parent=11 // pred_check
        %p121 = pneg %p77
      $region18: #{forward.5} parent=11 // pred_check_branch
        %123 = sbr.rel (%p121) target = $region20
      $region19: #{forward.5} parent=11 // pred_region
        _
      $region20: #{forward.5} parent=11 // pred_fallthru
        _
    $region12: #{forward.5} parent=5 // pred_fallthru
      _
    %p124 = scmp.lt.s32.totalorder %s9, 4
    // Predicated region
    $region21: #{forward.5} parent=5 // pred_check
      %p125 = pneg %p124
    $region22: #{forward.5} parent=5 // pred_check_branch
      %127 = sbr.rel (%p125) target = $region24
    $region23: #{forward.5} parent=5 // pred_region
      // Predicated region
      $region25: #{forward.5} parent=23 // pred_check
        %p128 = pneg %p29
      $region26: #{forward.5} parent=23 // pred_check_branch
        %130 = sbr.rel (%p128) target = $region28
      $region27: #{forward.5} parent=23 // pred_region
        %s131 = smul.u32 64, %s9
        %p132 = scmp.lt.s32.totalorder %s131, 255
        %s133 = scalar_select %p132, %s131, 255
        %s134 = smul.addr %s133, 4
        %s135 = scalar_lea.vmem %s0, %s134
        %s136 = smul.u32 64, %s9
      $region28: #{forward.5} parent=23 // pred_fallthru
        _
    $region24: #{forward.5} parent=5 // pred_fallthru
      _
    %p137 = scmp.le.s32.totalorder 1, %s9
    %p138 = scmp.lt.s32.totalorder %s9, 5
    %p139 = pnand %p137, %p138
    %p140 = pneg %p139
    // Predicated region
    $region29: #{forward.5} parent=5 // pred_check
      _
    $region30: #{forward.5} parent=5 // pred_check_branch
      %142 = sbr.rel (%p139) target = $region32
    $region31: #{forward.5} parent=5 // pred_region
      %s143 = ssub.s32 %s9, 1
      %s144 = smul.u32 64, %s14
      %p145 = scmp.lt.s32.totalorder %s144, 255
      %s146 = scalar_select %p145, %s144, 255
      %s147 = smul.addr %s146, 4
      %s148 = scalar_lea.vmem %s0, %s147
      %p149 = pneg %p35
      %p150 = pneg %p32
      %p151 = pneg %p56
      %p152 = pneg %p53
      %p153 = pneg %p77
      %p154 = pneg %p74
      %p155 = pneg %p103
      %p156 = pneg %p100
      %s157 = smul.u32 64, %s14
      %p158 = scmp.lt.s32.totalorder %s157, 255
      %s159 = scalar_select %p158, %s157, 255
      %s160 = smul.addr %s159, 4
      %s161 = scalar_lea.vmem %s3, %s160
      %s162 = smul.u32 64, %s14
      %p163 = scmp.lt.s32.totalorder %s162, 255
      %s164 = scalar_select %p163, %s162, 255
      %s165 = smul.addr %s164, 4
      %s166 = scalar_lea.vmem %s0, %s165
      %s167 = smul.u32 64, %s14
      %s168 = smul.u32 64, %s14
      %p169 = scmp.lt.s32.totalorder %s168, 255
      %s170 = scalar_select %p169, %s168, 255
      %s171 = smul.addr %s170, 4
      %s172 = scalar_lea.vmem %s3, %s171
      %s173 = smul.u32 64, %s14
      %v175 = vld [vmem:[%s166] sm:$0xf]
      %v176 = vld [vmem:[%s166 + $0x4] sm:$0xf]
      %v177 = vld [vmem:[%s166 + $0x8] sm:$0xf]
      %v178 = vld [vmem:[%s166 + $0xc] sm:$0xf]
      %v179 = vld [vmem:[%s166 + $0x10] sm:$0xf]
      %v180 = vld [vmem:[%s166 + $0x14] sm:$0xf]
      %v181 = vld [vmem:[%s166 + $0x18] sm:$0xf]
      %v182 = vld [vmem:[%s166 + $0x1c] sm:$0xf]
      %v183 = vld [vmem:[%s166 + $0x20] sm:$0xf]
      %v184 = vld [vmem:[%s166 + $0x24] sm:$0xf]
      %v185 = vld [vmem:[%s166 + $0x28] sm:$0xf]
      %v186 = vld [vmem:[%s166 + $0x2c] sm:$0xf]
      %v187 = vld [vmem:[%s166 + $0x30] sm:$0xf]
      %v188 = vld [vmem:[%s166 + $0x34] sm:$0xf]
      %v189 = vld [vmem:[%s166 + $0x38] sm:$0xf]
      %v190 = vld [vmem:[%s166 + $0x3c] sm:$0xf]
      %v191 = vld [vmem:[%s166 + $0x40] sm:$0xf]
      %v192 = vld [vmem:[%s166 + $0x44] sm:$0xf]
      %v193 = vld [vmem:[%s166 + $0x48] sm:$0xf]
      %v194 = vld [vmem:[%s166 + $0x4c] sm:$0xf]
      %v195 = vld [vmem:[%s166 + $0x50] sm:$0xf]
      %v196 = vld [vmem:[%s166 + $0x54] sm:$0xf]
      %v197 = vld [vmem:[%s166 + $0x58] sm:$0xf]
      %v198 = vld [vmem:[%s166 + $0x5c] sm:$0xf]
      %v199 = vld [vmem:[%s166 + $0x60] sm:$0xf]
      %v200 = vld [vmem:[%s166 + $0x64] sm:$0xf]
      %v201 = vld [vmem:[%s166 + $0x68] sm:$0xf]
      %v202 = vld [vmem:[%s166 + $0x6c] sm:$0xf]
      %v203 = vld [vmem:[%s166 + $0x70] sm:$0xf]
      %v204 = vld [vmem:[%s166 + $0x74] sm:$0xf]
      %v205 = vld [vmem:[%s166 + $0x78] sm:$0xf]
      %v206 = vld [vmem:[%s166 + $0x7c] sm:$0xf]
      %v207 = vld [vmem:[%s166 + $0x80] sm:$0xf]
      %v208 = vld [vmem:[%s166 + $0x84] sm:$0xf]
      %v209 = vld [vmem:[%s166 + $0x88] sm:$0xf]
      %v210 = vld [vmem:[%s166 + $0x8c] sm:$0xf]
      %v211 = vld [vmem:[%s166 + $0x90] sm:$0xf]
      %v212 = vld [vmem:[%s166 + $0x94] sm:$0xf]
      %v213 = vld [vmem:[%s166 + $0x98] sm:$0xf]
      %v214 = vld [vmem:[%s166 + $0x9c] sm:$0xf]
      %v215 = vld [vmem:[%s166 + $0xa0] sm:$0xf]
      %v216 = vld [vmem:[%s166 + $0xa4] sm:$0xf]
      %v217 = vld [vmem:[%s166 + $0xa8] sm:$0xf]
      %v218 = vld [vmem:[%s166 + $0xac] sm:$0xf]
      %v219 = vld [vmem:[%s166 + $0xb0] sm:$0xf]
      %v220 = vld [vmem:[%s166 + $0xb4] sm:$0xf]
      %v221 = vld [vmem:[%s166 + $0xb8] sm:$0xf]
      %v222 = vld [vmem:[%s166 + $0xbc] sm:$0xf]
      %v223 = vld [vmem:[%s166 + $0xc0] sm:$0xf]
      %v224 = vld [vmem:[%s166 + $0xc4] sm:$0xf]
      %v225 = vld [vmem:[%s166 + $0xc8] sm:$0xf]
      %v226 = vld [vmem:[%s166 + $0xcc] sm:$0xf]
      %v227 = vld [vmem:[%s166 + $0xd0] sm:$0xf]
      %v228 = vld [vmem:[%s166 + $0xd4] sm:$0xf]
      %v229 = vld [vmem:[%s166 + $0xd8] sm:$0xf]
      %v230 = vld [vmem:[%s166 + $0xdc] sm:$0xf]
      %v231 = vld [vmem:[%s166 + $0xe0] sm:$0xf]
      %v232 = vld [vmem:[%s166 + $0xe4] sm:$0xf]
      %v233 = vld [vmem:[%s166 + $0xe8] sm:$0xf]
      %v234 = vld [vmem:[%s166 + $0xec] sm:$0xf]
      %v235 = vld [vmem:[%s166 + $0xf0] sm:$0xf]
      %v236 = vld [vmem:[%s166 + $0xf4] sm:$0xf]
      %v237 = vld [vmem:[%s166 + $0xf8] sm:$0xf]
      %v238 = vld [vmem:[%s166 + $0xfc] sm:$0xf]
      %v239 = vld [vmem:[%s1] sm:$0xf]
      %v240 = vld [vmem:[%s1 + $0x4] sm:$0xf]
      %v241 = vld [vmem:[%s1 + $0x8] sm:$0xf]
      %v242 = vld [vmem:[%s1 + $0xc] sm:$0xf]
      %v243 = vld [vmem:[%s1 + $0x10] sm:$0xf]
      %v244 = vld [vmem:[%s1 + $0x14] sm:$0xf]
      %v245 = vld [vmem:[%s1 + $0x18] sm:$0xf]
      %v246 = vld [vmem:[%s1 + $0x1c] sm:$0xf]
      %v247 = vld [vmem:[%s1 + $0x20] sm:$0xf]
      %v248 = vld [vmem:[%s1 + $0x24] sm:$0xf]
      %v249 = vld [vmem:[%s1 + $0x28] sm:$0xf]
      %v250 = vld [vmem:[%s1 + $0x2c] sm:$0xf]
      %v251 = vld [vmem:[%s1 + $0x30] sm:$0xf]
      %v252 = vld [vmem:[%s1 + $0x34] sm:$0xf]
      %v253 = vld [vmem:[%s1 + $0x38] sm:$0xf]
      %v254 = vld [vmem:[%s1 + $0x3c] sm:$0xf]
      %v255 = vld [vmem:[%s2] sm:$0x1]
      %v257 = vlaneseq
      %v258 = vshrl.u32 %v257, 7
      %v259 = vsub.s32 0, %v258
      %v260 = vrot.slane %v255, %v259
      %v326 = vunpack.c.l.b16 %v175
      %v327 = vunpack.c.l.b16 %v176
      %v328 = vunpack.c.l.b16 %v177
      %v329 = vunpack.c.l.b16 %v178
      %v330 = vunpack.c.l.b16 %v179
      %v331 = vunpack.c.l.b16 %v180
      %v332 = vunpack.c.l.b16 %v181
      %v333 = vunpack.c.l.b16 %v182
      %v334 = vunpack.c.l.b16 %v183
      %v335 = vunpack.c.l.b16 %v184
      %v336 = vunpack.c.l.b16 %v185
      %v337 = vunpack.c.l.b16 %v186
      %v338 = vunpack.c.l.b16 %v187
      %v339 = vunpack.c.l.b16 %v188
      %v340 = vunpack.c.l.b16 %v189
      %v341 = vunpack.c.l.b16 %v190
      %v342 = vunpack.c.l.b16 %v191
      %v343 = vunpack.c.l.b16 %v192
      %v344 = vunpack.c.l.b16 %v193
      %v345 = vunpack.c.l.b16 %v194
      %v346 = vunpack.c.l.b16 %v195
      %v347 = vunpack.c.l.b16 %v196
      %v348 = vunpack.c.l.b16 %v197
      %v349 = vunpack.c.l.b16 %v198
      %v350 = vunpack.c.l.b16 %v199
      %v351 = vunpack.c.l.b16 %v200
      %v352 = vunpack.c.l.b16 %v201
      %v353 = vunpack.c.l.b16 %v202
      %v354 = vunpack.c.l.b16 %v203
      %v355 = vunpack.c.l.b16 %v204
      %v356 = vunpack.c.l.b16 %v205
      %v357 = vunpack.c.l.b16 %v206
      %v358 = vunpack.c.l.b16 %v207
      %v359 = vunpack.c.l.b16 %v208
      %v360 = vunpack.c.l.b16 %v209
      %v361 = vunpack.c.l.b16 %v210
      %v362 = vunpack.c.l.b16 %v211
      %v363 = vunpack.c.l.b16 %v212
      %v364 = vunpack.c.l.b16 %v213
      %v365 = vunpack.c.l.b16 %v214
      %v366 = vunpack.c.l.b16 %v215
      %v367 = vunpack.c.l.b16 %v216
      %v368 = vunpack.c.l.b16 %v217
      %v369 = vunpack.c.l.b16 %v218
      %v370 = vunpack.c.l.b16 %v219
      %v371 = vunpack.c.l.b16 %v220
      %v372 = vunpack.c.l.b16 %v221
      %v373 = vunpack.c.l.b16 %v222
      %v374 = vunpack.c.l.b16 %v223
      %v375 = vunpack.c.l.b16 %v224
      %v376 = vunpack.c.l.b16 %v225
      %v377 = vunpack.c.l.b16 %v226
      %v378 = vunpack.c.l.b16 %v227
      %v379 = vunpack.c.l.b16 %v228
      %v380 = vunpack.c.l.b16 %v229
      %v381 = vunpack.c.l.b16 %v230
      %v382 = vunpack.c.l.b16 %v231
      %v383 = vunpack.c.l.b16 %v232
      %v384 = vunpack.c.l.b16 %v233
      %v385 = vunpack.c.l.b16 %v234
      %v386 = vunpack.c.l.b16 %v235
      %v387 = vunpack.c.l.b16 %v236
      %v388 = vunpack.c.l.b16 %v237
      %v389 = vunpack.c.l.b16 %v238
      %v390 = vpack.c.b16 %v327, %v326
      %v391 = vpack.c.b16 %v329, %v328
      %v392 = vpack.c.b16 %v331, %v330
      %v393 = vpack.c.b16 %v333, %v332
      %v394 = vpack.c.b16 %v335, %v334
      %v395 = vpack.c.b16 %v337, %v336
      %v396 = vpack.c.b16 %v339, %v338
      %v397 = vpack.c.b16 %v341, %v340
      %v398 = vpack.c.b16 %v343, %v342
      %v399 = vpack.c.b16 %v345, %v344
      %v400 = vpack.c.b16 %v347, %v346
      %v401 = vpack.c.b16 %v349, %v348
      %v402 = vpack.c.b16 %v351, %v350
      %v403 = vpack.c.b16 %v353, %v352
      %v404 = vpack.c.b16 %v355, %v354
      %v405 = vpack.c.b16 %v357, %v356
      %v406 = vpack.c.b16 %v359, %v358
      %v407 = vpack.c.b16 %v361, %v360
      %v408 = vpack.c.b16 %v363, %v362
      %v409 = vpack.c.b16 %v365, %v364
      %v410 = vpack.c.b16 %v367, %v366
      %v411 = vpack.c.b16 %v369, %v368
      %v412 = vpack.c.b16 %v371, %v370
      %v413 = vpack.c.b16 %v373, %v372
      %v414 = vpack.c.b16 %v375, %v374
      %v415 = vpack.c.b16 %v377, %v376
      %v416 = vpack.c.b16 %v379, %v378
      %v417 = vpack.c.b16 %v381, %v380
      %v418 = vpack.c.b16 %v383, %v382
      %v419 = vpack.c.b16 %v385, %v384
      %v420 = vpack.c.b16 %v387, %v386
      %v421 = vpack.c.b16 %v389, %v388
      %v470 = vunpack.c.l.b16 %v239
      %v471 = vunpack.c.l.b16 %v240
      %v472 = vunpack.c.l.b16 %v241
      %v473 = vunpack.c.l.b16 %v242
      %v474 = vunpack.c.l.b16 %v243
      %v475 = vunpack.c.l.b16 %v244
      %v476 = vunpack.c.l.b16 %v245
      %v477 = vunpack.c.l.b16 %v246
      %v478 = vunpack.c.l.b16 %v247
      %v479 = vunpack.c.l.b16 %v248
      %v480 = vunpack.c.l.b16 %v249
      %v481 = vunpack.c.l.b16 %v250
      %v482 = vunpack.c.l.b16 %v251
      %v483 = vunpack.c.l.b16 %v252
      %v484 = vunpack.c.l.b16 %v253
      %v485 = vunpack.c.l.b16 %v254
      %v486 = vpack.c.b16 %v471, %v470
      %v487 = vpack.c.b16 %v473, %v472
      %v488 = vpack.c.b16 %v475, %v474
      %v489 = vpack.c.b16 %v477, %v476
      %v490 = vpack.c.b16 %v479, %v478
      %v491 = vpack.c.b16 %v481, %v480
      %v492 = vpack.c.b16 %v483, %v482
      %v493 = vpack.c.b16 %v485, %v484
      %502 = vmatprep.subr.bf16.mxu0 0
      %503 = vmatpush1.bf16.msra.mxu0 %v493
      %504 = vmatprep.subr.bf16.mxu0 0
      %505 = vmatpush1.bf16.msra.mxu0 %v492
      %506 = vmatprep.subr.bf16.mxu0 0
      %507 = vmatpush1.bf16.msra.mxu0 %v491
      %508 = vmatprep.subr.bf16.mxu0 0
      %509 = vmatpush1.bf16.msra.mxu0 %v490
      %510 = vmatprep.subr.bf16.mxu0 0
      %511 = vmatpush1.bf16.msra.mxu0 %v489
      %512 = vmatprep.subr.bf16.mxu0 0
      %513 = vmatpush1.bf16.msra.mxu0 %v488
      %514 = vmatprep.subr.bf16.mxu0 0
      %515 = vmatpush1.bf16.msra.mxu0 %v487
      %516 = vmatprep.subr.bf16.mxu0 0
      %517 = vmatpush1.bf16.msra.mxu0 %v486
      %518 = vmatprep.subr.bf16.mxu0 0
      %519 = vmatpush2.bf16.msra.mxu0 0
      %520 = vmatprep.subr.bf16.mxu0 0
      %521 = vmatpush2.bf16.msra.mxu0 0
      %522 = vmatprep.subr.bf16.mxu0 0
      %523 = vmatpush2.bf16.msra.mxu0 0
      %524 = vmatprep.subr.bf16.mxu0 0
      %525 = vmatpush2.bf16.msra.mxu0 0
      %526 = vmatprep.subr.bf16.mxu0 0
      %527 = vmatpush2.bf16.msra.mxu0 0
      %528 = vmatprep.subr.bf16.mxu0 0
      %529 = vmatpush2.bf16.msra.mxu0 0
      %530 = vmatprep.subr.bf16.mxu0 0
      %531 = vmatpush2.bf16.msra.mxu0 0
      %532 = vmatprep.subr.bf16.mxu0 0
      %533 = vmatpush2.bf16.msra.mxu0 0
      %534 = vmatprep.mubr.bf16.mxu0 0
      %535 = vmatmul.mubr.bf16.gmra.mxu0 %v390
      %v536 = vpop.f32.mrf.mxu0
      %v537 = vadd.f32 %v260, %v536
      %v538 = vpop.f32.mrf.mxu0
      %v539 = vpop.f32.mrf.mxu0
      %v540 = vadd.f32 %v260, %v539
      %v541 = vpop.f32.mrf.mxu0
      %542 = vmatprep.mubr.bf16.mxu0 0
      %543 = vmatmul.mubr.bf16.gmra.mxu0 %v391
      %v544 = vpop.f32.mrf.mxu0
      %v545 = vadd.f32 %v260, %v544
      %v546 = vpop.f32.mrf.mxu0
      %v547 = vpop.f32.mrf.mxu0
      %v548 = vadd.f32 %v260, %v547
      %v549 = vpop.f32.mrf.mxu0
      %550 = vmatprep.mubr.bf16.mxu0 0
      %551 = vmatmul.mubr.bf16.gmra.mxu0 %v392
      %v552 = vpop.f32.mrf.mxu0
      %v553 = vadd.f32 %v260, %v552
      %v554 = vpop.f32.mrf.mxu0
      %v555 = vpop.f32.mrf.mxu0
      %v556 = vadd.f32 %v260, %v555
      %v557 = vpop.f32.mrf.mxu0
      %558 = vmatprep.mubr.bf16.mxu0 0
      %559 = vmatmul.mubr.bf16.gmra.mxu0 %v393
      %v560 = vpop.f32.mrf.mxu0
      %v561 = vadd.f32 %v260, %v560
      %v562 = vpop.f32.mrf.mxu0
      %v563 = vpop.f32.mrf.mxu0
      %v564 = vadd.f32 %v260, %v563
      %v565 = vpop.f32.mrf.mxu0
      %566 = vmatprep.mubr.bf16.mxu0 0
      %567 = vmatmul.mubr.bf16.gmra.mxu0 %v394
      %v568 = vpop.f32.mrf.mxu0
      %v569 = vadd.f32 %v260, %v568
      %v570 = vpop.f32.mrf.mxu0
      %v571 = vpop.f32.mrf.mxu0
      %v572 = vadd.f32 %v260, %v571
      %v573 = vpop.f32.mrf.mxu0
      %574 = vmatprep.mubr.bf16.mxu0 0
      %575 = vmatmul.mubr.bf16.gmra.mxu0 %v395
      %v576 = vpop.f32.mrf.mxu0
      %v577 = vadd.f32 %v260, %v576
      %v578 = vpop.f32.mrf.mxu0
      %v579 = vpop.f32.mrf.mxu0
      %v580 = vadd.f32 %v260, %v579
      %v581 = vpop.f32.mrf.mxu0
      %582 = vmatprep.mubr.bf16.mxu0 0
      %583 = vmatmul.mubr.bf16.gmra.mxu0 %v396
      %v584 = vpop.f32.mrf.mxu0
      %v585 = vadd.f32 %v260, %v584
      %v586 = vpop.f32.mrf.mxu0
      %v587 = vpop.f32.mrf.mxu0
      %v588 = vadd.f32 %v260, %v587
      %v589 = vpop.f32.mrf.mxu0
      %590 = vmatprep.mubr.bf16.mxu0 0
      %591 = vmatmul.mubr.bf16.gmra.mxu0 %v397
      %v592 = vpop.f32.mrf.mxu0
      %v593 = vadd.f32 %v260, %v592
      %v594 = vpop.f32.mrf.mxu0
      %v595 = vpop.f32.mrf.mxu0
      %v596 = vadd.f32 %v260, %v595
      %v597 = vpop.f32.mrf.mxu0
      %598 = vmatprep.mubr.bf16.mxu0 0
      %599 = vmatmul.mubr.bf16.gmra.mxu0 %v398
      %v600 = vpop.f32.mrf.mxu0
      %v601 = vadd.f32 %v260, %v600
      %v602 = vpop.f32.mrf.mxu0
      %v603 = vpop.f32.mrf.mxu0
      %v604 = vadd.f32 %v260, %v603
      %v605 = vpop.f32.mrf.mxu0
      %606 = vmatprep.mubr.bf16.mxu0 0
      %607 = vmatmul.mubr.bf16.gmra.mxu0 %v399
      %v608 = vpop.f32.mrf.mxu0
      %v609 = vadd.f32 %v260, %v608
      %v610 = vpop.f32.mrf.mxu0
      %v611 = vpop.f32.mrf.mxu0
      %v612 = vadd.f32 %v260, %v611
      %v613 = vpop.f32.mrf.mxu0
      %614 = vmatprep.mubr.bf16.mxu0 0
      %615 = vmatmul.mubr.bf16.gmra.mxu0 %v400
      %v616 = vpop.f32.mrf.mxu0
      %v617 = vadd.f32 %v260, %v616
      %v618 = vpop.f32.mrf.mxu0
      %v619 = vpop.f32.mrf.mxu0
      %v620 = vadd.f32 %v260, %v619
      %v621 = vpop.f32.mrf.mxu0
      %622 = vmatprep.mubr.bf16.mxu0 0
      %623 = vmatmul.mubr.bf16.gmra.mxu0 %v401
      %v624 = vpop.f32.mrf.mxu0
      %v625 = vadd.f32 %v260, %v624
      %v626 = vpop.f32.mrf.mxu0
      %v627 = vpop.f32.mrf.mxu0
      %v628 = vadd.f32 %v260, %v627
      %v629 = vpop.f32.mrf.mxu0
      %630 = vmatprep.mubr.bf16.mxu0 0
      %631 = vmatmul.mubr.bf16.gmra.mxu0 %v402
      %v632 = vpop.f32.mrf.mxu0
      %v633 = vadd.f32 %v260, %v632
      %v634 = vpop.f32.mrf.mxu0
      %v635 = vpop.f32.mrf.mxu0
      %v636 = vadd.f32 %v260, %v635
      %v637 = vpop.f32.mrf.mxu0
      %638 = vmatprep.mubr.bf16.mxu0 0
      %639 = vmatmul.mubr.bf16.gmra.mxu0 %v403
      %v640 = vpop.f32.mrf.mxu0
      %v641 = vadd.f32 %v260, %v640
      %v642 = vpop.f32.mrf.mxu0
      %v643 = vpop.f32.mrf.mxu0
      %v644 = vadd.f32 %v260, %v643
      %v645 = vpop.f32.mrf.mxu0
      %646 = vmatprep.mubr.bf16.mxu0 0
      %647 = vmatmul.mubr.bf16.gmra.mxu0 %v404
      %v648 = vpop.f32.mrf.mxu0
      %v649 = vadd.f32 %v260, %v648
      %v650 = vpop.f32.mrf.mxu0
      %v651 = vpop.f32.mrf.mxu0
      %v652 = vadd.f32 %v260, %v651
      %v653 = vpop.f32.mrf.mxu0
      %654 = vmatprep.mubr.bf16.mxu0 0
      %655 = vmatmul.mubr.bf16.gmra.mxu0 %v405
      %v656 = vpop.f32.mrf.mxu0
      %v657 = vadd.f32 %v260, %v656
      %v658 = vpop.f32.mrf.mxu0
      %v659 = vpop.f32.mrf.mxu0
      %v660 = vadd.f32 %v260, %v659
      %v661 = vpop.f32.mrf.mxu0
      %662 = vmatprep.mubr.bf16.mxu0 0
      %663 = vmatmul.mubr.bf16.gmra.mxu0 %v406
      %v664 = vpop.f32.mrf.mxu0
      %v665 = vadd.f32 %v260, %v664
      %v666 = vpop.f32.mrf.mxu0
      %v667 = vpop.f32.mrf.mxu0
      %v668 = vadd.f32 %v260, %v667
      %v669 = vpop.f32.mrf.mxu0
      %670 = vmatprep.mubr.bf16.mxu0 0
      %671 = vmatmul.mubr.bf16.gmra.mxu0 %v407
      %v672 = vpop.f32.mrf.mxu0
      %v673 = vadd.f32 %v260, %v672
      %v674 = vpop.f32.mrf.mxu0
      %v675 = vpop.f32.mrf.mxu0
      %v676 = vadd.f32 %v260, %v675
      %v677 = vpop.f32.mrf.mxu0
      %678 = vmatprep.mubr.bf16.mxu0 0
      %679 = vmatmul.mubr.bf16.gmra.mxu0 %v408
      %v680 = vpop.f32.mrf.mxu0
      %v681 = vadd.f32 %v260, %v680
      %v682 = vpop.f32.mrf.mxu0
      %v683 = vpop.f32.mrf.mxu0
      %v684 = vadd.f32 %v260, %v683
      %v685 = vpop.f32.mrf.mxu0
      %686 = vmatprep.mubr.bf16.mxu0 0
      %687 = vmatmul.mubr.bf16.gmra.mxu0 %v409
      %v688 = vpop.f32.mrf.mxu0
      %v689 = vadd.f32 %v260, %v688
      %v690 = vpop.f32.mrf.mxu0
      %v691 = vpop.f32.mrf.mxu0
      %v692 = vadd.f32 %v260, %v691
      %v693 = vpop.f32.mrf.mxu0
      %694 = vmatprep.mubr.bf16.mxu0 0
      %695 = vmatmul.mubr.bf16.gmra.mxu0 %v410
      %v696 = vpop.f32.mrf.mxu0
      %v697 = vadd.f32 %v260, %v696
      %v698 = vpop.f32.mrf.mxu0
      %v699 = vpop.f32.mrf.mxu0
      %v700 = vadd.f32 %v260, %v699
      %v701 = vpop.f32.mrf.mxu0
      %702 = vmatprep.mubr.bf16.mxu0 0
      %703 = vmatmul.mubr.bf16.gmra.mxu0 %v411
      %v704 = vpop.f32.mrf.mxu0
      %v705 = vadd.f32 %v260, %v704
      %v706 = vpop.f32.mrf.mxu0
      %v707 = vpop.f32.mrf.mxu0
      %v708 = vadd.f32 %v260, %v707
      %v709 = vpop.f32.mrf.mxu0
      %710 = vmatprep.mubr.bf16.mxu0 0
      %711 = vmatmul.mubr.bf16.gmra.mxu0 %v412
      %v712 = vpop.f32.mrf.mxu0
      %v713 = vadd.f32 %v260, %v712
      %v714 = vpop.f32.mrf.mxu0
      %v715 = vpop.f32.mrf.mxu0
      %v716 = vadd.f32 %v260, %v715
      %v717 = vpop.f32.mrf.mxu0
      %718 = vmatprep.mubr.bf16.mxu0 0
      %719 = vmatmul.mubr.bf16.gmra.mxu0 %v413
      %v720 = vpop.f32.mrf.mxu0
      %v721 = vadd.f32 %v260, %v720
      %v722 = vpop.f32.mrf.mxu0
      %v723 = vpop.f32.mrf.mxu0
      %v724 = vadd.f32 %v260, %v723
      %v725 = vpop.f32.mrf.mxu0
      %726 = vmatprep.mubr.bf16.mxu0 0
      %727 = vmatmul.mubr.bf16.gmra.mxu0 %v414
      %v728 = vpop.f32.mrf.mxu0
      %v729 = vadd.f32 %v260, %v728
      %v730 = vpop.f32.mrf.mxu0
      %v731 = vpop.f32.mrf.mxu0
      %v732 = vadd.f32 %v260, %v731
      %v733 = vpop.f32.mrf.mxu0
      %734 = vmatprep.mubr.bf16.mxu0 0
      %735 = vmatmul.mubr.bf16.gmra.mxu0 %v415
      %v736 = vpop.f32.mrf.mxu0
      %v737 = vadd.f32 %v260, %v736
      %v738 = vpop.f32.mrf.mxu0
      %v739 = vpop.f32.mrf.mxu0
      %v740 = vadd.f32 %v260, %v739
      %v741 = vpop.f32.mrf.mxu0
      %742 = vmatprep.mubr.bf16.mxu0 0
      %743 = vmatmul.mubr.bf16.gmra.mxu0 %v416
      %v744 = vpop.f32.mrf.mxu0
      %v745 = vadd.f32 %v260, %v744
      %v746 = vpop.f32.mrf.mxu0
      %v747 = vpop.f32.mrf.mxu0
      %v748 = vadd.f32 %v260, %v747
      %v749 = vpop.f32.mrf.mxu0
      %750 = vmatprep.mubr.bf16.mxu0 0
      %751 = vmatmul.mubr.bf16.gmra.mxu0 %v417
      %v752 = vpop.f32.mrf.mxu0
      %v753 = vadd.f32 %v260, %v752
      %v754 = vpop.f32.mrf.mxu0
      %v755 = vpop.f32.mrf.mxu0
      %v756 = vadd.f32 %v260, %v755
      %v757 = vpop.f32.mrf.mxu0
      %758 = vmatprep.mubr.bf16.mxu0 0
      %759 = vmatmul.mubr.bf16.gmra.mxu0 %v418
      %v760 = vpop.f32.mrf.mxu0
      %v761 = vadd.f32 %v260, %v760
      %v762 = vpop.f32.mrf.mxu0
      %v763 = vpop.f32.mrf.mxu0
      %v764 = vadd.f32 %v260, %v763
      %v765 = vpop.f32.mrf.mxu0
      %766 = vmatprep.mubr.bf16.mxu0 0
      %767 = vmatmul.mubr.bf16.gmra.mxu0 %v419
      %v768 = vpop.f32.mrf.mxu0
      %v769 = vadd.f32 %v260, %v768
      %v770 = vpop.f32.mrf.mxu0
      %v771 = vpop.f32.mrf.mxu0
      %v772 = vadd.f32 %v260, %v771
      %v773 = vpop.f32.mrf.mxu0
      %774 = vmatprep.mubr.bf16.mxu0 0
      %775 = vmatmul.mubr.bf16.gmra.mxu0 %v420
      %v776 = vpop.f32.mrf.mxu0
      %v777 = vadd.f32 %v260, %v776
      %v778 = vpop.f32.mrf.mxu0
      %v779 = vpop.f32.mrf.mxu0
      %v780 = vadd.f32 %v260, %v779
      %v781 = vpop.f32.mrf.mxu0
      %782 = vmatprep.mubr.bf16.mxu0 0
      %783 = vmatmul.mubr.bf16.gmra.mxu0 %v421
      %v784 = vpop.f32.mrf.mxu0
      %v785 = vadd.f32 %v260, %v784
      %v786 = vpop.f32.mrf.mxu0
      %v787 = vpop.f32.mrf.mxu0
      %v788 = vadd.f32 %v260, %v787
      %v789 = vpop.f32.mrf.mxu0
      %790 = vdwg.mxu0
      %v791 = vmax.f32 %v537, 0.0
      %v792 = vmax.f32 %v540, 0.0
      %v793 = vmax.f32 %v545, 0.0
      %v794 = vmax.f32 %v548, 0.0
      %v795 = vmax.f32 %v553, 0.0
      %v796 = vmax.f32 %v556, 0.0
      %v797 = vmax.f32 %v561, 0.0
      %v798 = vmax.f32 %v564, 0.0
      %v799 = vmax.f32 %v569, 0.0
      %v800 = vmax.f32 %v572, 0.0
      %v801 = vmax.f32 %v577, 0.0
      %v802 = vmax.f32 %v580, 0.0
      %v803 = vmax.f32 %v585, 0.0
      %v804 = vmax.f32 %v588, 0.0
      %v805 = vmax.f32 %v593, 0.0
      %v806 = vmax.f32 %v596, 0.0
      %v807 = vmax.f32 %v601, 0.0
      %v808 = vmax.f32 %v604, 0.0
      %v809 = vmax.f32 %v609, 0.0
      %v810 = vmax.f32 %v612, 0.0
      %v811 = vmax.f32 %v617, 0.0
      %v812 = vmax.f32 %v620, 0.0
      %v813 = vmax.f32 %v625, 0.0
      %v814 = vmax.f32 %v628, 0.0
      %v815 = vmax.f32 %v633, 0.0
      %v816 = vmax.f32 %v636, 0.0
      %v817 = vmax.f32 %v641, 0.0
      %v818 = vmax.f32 %v644, 0.0
      %v819 = vmax.f32 %v649, 0.0
      %v820 = vmax.f32 %v652, 0.0
      %v821 = vmax.f32 %v657, 0.0
      %v822 = vmax.f32 %v660, 0.0
      %v823 = vmax.f32 %v665, 0.0
      %v824 = vmax.f32 %v668, 0.0
      %v825 = vmax.f32 %v673, 0.0
      %v826 = vmax.f32 %v676, 0.0
      %v827 = vmax.f32 %v681, 0.0
      %v828 = vmax.f32 %v684, 0.0
      %v829 = vmax.f32 %v689, 0.0
      %v830 = vmax.f32 %v692, 0.0
      %v831 = vmax.f32 %v697, 0.0
      %v832 = vmax.f32 %v700, 0.0
      %v833 = vmax.f32 %v705, 0.0
      %v834 = vmax.f32 %v708, 0.0
      %v835 = vmax.f32 %v713, 0.0
      %v836 = vmax.f32 %v716, 0.0
      %v837 = vmax.f32 %v721, 0.0
      %v838 = vmax.f32 %v724, 0.0
      %v839 = vmax.f32 %v729, 0.0
      %v840 = vmax.f32 %v732, 0.0
      %v841 = vmax.f32 %v737, 0.0
      %v842 = vmax.f32 %v740, 0.0
      %v843 = vmax.f32 %v745, 0.0
      %v844 = vmax.f32 %v748, 0.0
      %v845 = vmax.f32 %v753, 0.0
      %v846 = vmax.f32 %v756, 0.0
      %v847 = vmax.f32 %v761, 0.0
      %v848 = vmax.f32 %v764, 0.0
      %v849 = vmax.f32 %v769, 0.0
      %v850 = vmax.f32 %v772, 0.0
      %v851 = vmax.f32 %v777, 0.0
      %v852 = vmax.f32 %v780, 0.0
      %v853 = vmax.f32 %v785, 0.0
      %v854 = vmax.f32 %v788, 0.0
      %v855 = vpack.c.bf16 %v792, %v791
      %v856 = vpack.c.bf16 %v794, %v793
      %v857 = vpack.c.bf16 %v796, %v795
      %v858 = vpack.c.bf16 %v798, %v797
      %v859 = vpack.c.bf16 %v800, %v799
      %v860 = vpack.c.bf16 %v802, %v801
      %v861 = vpack.c.bf16 %v804, %v803
      %v862 = vpack.c.bf16 %v806, %v805
      %v863 = vpack.c.bf16 %v808, %v807
      %v864 = vpack.c.bf16 %v810, %v809
      %v865 = vpack.c.bf16 %v812, %v811
      %v866 = vpack.c.bf16 %v814, %v813
      %v867 = vpack.c.bf16 %v816, %v815
      %v868 = vpack.c.bf16 %v818, %v817
      %v869 = vpack.c.bf16 %v820, %v819
      %v870 = vpack.c.bf16 %v822, %v821
      %v871 = vpack.c.bf16 %v824, %v823
      %v872 = vpack.c.bf16 %v826, %v825
      %v873 = vpack.c.bf16 %v828, %v827
      %v874 = vpack.c.bf16 %v830, %v829
      %v875 = vpack.c.bf16 %v832, %v831
      %v876 = vpack.c.bf16 %v834, %v833
      %v877 = vpack.c.bf16 %v836, %v835
      %v878 = vpack.c.bf16 %v838, %v837
      %v879 = vpack.c.bf16 %v840, %v839
      %v880 = vpack.c.bf16 %v842, %v841
      %v881 = vpack.c.bf16 %v844, %v843
      %v882 = vpack.c.bf16 %v846, %v845
      %v883 = vpack.c.bf16 %v848, %v847
      %v884 = vpack.c.bf16 %v850, %v849
      %v885 = vpack.c.bf16 %v852, %v851
      %v886 = vpack.c.bf16 %v854, %v853
      %v919 = vunpack.c.l.b16 %v855
      %v920 = vunpack.c.h.b16 %v855
      %v921 = vunpack.c.l.b16 %v856
      %v922 = vunpack.c.h.b16 %v856
      %v923 = vunpack.c.l.b16 %v857
      %v924 = vunpack.c.h.b16 %v857
      %v925 = vunpack.c.l.b16 %v858
      %v926 = vunpack.c.h.b16 %v858
      %v927 = vunpack.c.l.b16 %v859
      %v928 = vunpack.c.h.b16 %v859
      %v929 = vunpack.c.l.b16 %v860
      %v930 = vunpack.c.h.b16 %v860
      %v931 = vunpack.c.l.b16 %v861
      %v932 = vunpack.c.h.b16 %v861
      %v933 = vunpack.c.l.b16 %v862
      %v934 = vunpack.c.h.b16 %v862
      %v935 = vunpack.c.l.b16 %v863
      %v936 = vunpack.c.h.b16 %v863
      %v937 = vunpack.c.l.b16 %v864
      %v938 = vunpack.c.h.b16 %v864
      %v939 = vunpack.c.l.b16 %v865
      %v940 = vunpack.c.h.b16 %v865
      %v941 = vunpack.c.l.b16 %v866
      %v942 = vunpack.c.h.b16 %v866
      %v943 = vunpack.c.l.b16 %v867
      %v944 = vunpack.c.h.b16 %v867
      %v945 = vunpack.c.l.b16 %v868
      %v946 = vunpack.c.h.b16 %v868
      %v947 = vunpack.c.l.b16 %v869
      %v948 = vunpack.c.h.b16 %v869
      %v949 = vunpack.c.l.b16 %v870
      %v950 = vunpack.c.h.b16 %v870
      %v951 = vunpack.c.l.b16 %v871
      %v952 = vunpack.c.h.b16 %v871
      %v953 = vunpack.c.l.b16 %v872
      %v954 = vunpack.c.h.b16 %v872
      %v955 = vunpack.c.l.b16 %v873
      %v956 = vunpack.c.h.b16 %v873
      %v957 = vunpack.c.l.b16 %v874
      %v958 = vunpack.c.h.b16 %v874
      %v959 = vunpack.c.l.b16 %v875
      %v960 = vunpack.c.h.b16 %v875
      %v961 = vunpack.c.l.b16 %v876
      %v962 = vunpack.c.h.b16 %v876
      %v963 = vunpack.c.l.b16 %v877
      %v964 = vunpack.c.h.b16 %v877
      %v965 = vunpack.c.l.b16 %v878
      %v966 = vunpack.c.h.b16 %v878
      %v967 = vunpack.c.l.b16 %v879
      %v968 = vunpack.c.h.b16 %v879
      %v969 = vunpack.c.l.b16 %v880
      %v970 = vunpack.c.h.b16 %v880
      %v971 = vunpack.c.l.b16 %v881
      %v972 = vunpack.c.h.b16 %v881
      %v973 = vunpack.c.l.b16 %v882
      %v974 = vunpack.c.h.b16 %v882
      %v975 = vunpack.c.l.b16 %v883
      %v976 = vunpack.c.h.b16 %v883
      %v977 = vunpack.c.l.b16 %v884
      %v978 = vunpack.c.h.b16 %v884
      %v979 = vunpack.c.l.b16 %v885
      %v980 = vunpack.c.h.b16 %v885
      %v981 = vunpack.c.l.b16 %v886
      %v982 = vunpack.c.h.b16 %v886
      %v983 = vpack.c.b16 %v919, %v919
      %v984 = vpack.c.b16 %v920, %v920
      %v985 = vpack.c.b16 %v921, %v921
      %v986 = vpack.c.b16 %v922, %v922
      %v987 = vpack.c.b16 %v923, %v923
      %v988 = vpack.c.b16 %v924, %v924
      %v989 = vpack.c.b16 %v925, %v925
      %v990 = vpack.c.b16 %v926, %v926
      %v991 = vpack.c.b16 %v927, %v927
      %v992 = vpack.c.b16 %v928, %v928
      %v993 = vpack.c.b16 %v929, %v929
      %v994 = vpack.c.b16 %v930, %v930
      %v995 = vpack.c.b16 %v931, %v931
      %v996 = vpack.c.b16 %v932, %v932
      %v997 = vpack.c.b16 %v933, %v933
      %v998 = vpack.c.b16 %v934, %v934
      %v999 = vpack.c.b16 %v935, %v935
      %v1000 = vpack.c.b16 %v936, %v936
      %v1001 = vpack.c.b16 %v937, %v937
      %v1002 = vpack.c.b16 %v938, %v938
      %v1003 = vpack.c.b16 %v939, %v939
      %v1004 = vpack.c.b16 %v940, %v940
      %v1005 = vpack.c.b16 %v941, %v941
      %v1006 = vpack.c.b16 %v942, %v942
      %v1007 = vpack.c.b16 %v943, %v943
      %v1008 = vpack.c.b16 %v944, %v944
      %v1009 = vpack.c.b16 %v945, %v945
      %v1010 = vpack.c.b16 %v946, %v946
      %v1011 = vpack.c.b16 %v947, %v947
      %v1012 = vpack.c.b16 %v948, %v948
      %v1013 = vpack.c.b16 %v949, %v949
      %v1014 = vpack.c.b16 %v950, %v950
      %v1015 = vpack.c.b16 %v951, %v951
      %v1016 = vpack.c.b16 %v952, %v952
      %v1017 = vpack.c.b16 %v953, %v953
      %v1018 = vpack.c.b16 %v954, %v954
      %v1019 = vpack.c.b16 %v955, %v955
      %v1020 = vpack.c.b16 %v956, %v956
      %v1021 = vpack.c.b16 %v957, %v957
      %v1022 = vpack.c.b16 %v958, %v958
      %v1023 = vpack.c.b16 %v959, %v959
      %v1024 = vpack.c.b16 %v960, %v960
      %v1025 = vpack.c.b16 %v961, %v961
      %v1026 = vpack.c.b16 %v962, %v962
      %v1027 = vpack.c.b16 %v963, %v963
      %v1028 = vpack.c.b16 %v964, %v964
      %v1029 = vpack.c.b16 %v965, %v965
      %v1030 = vpack.c.b16 %v966, %v966
      %v1031 = vpack.c.b16 %v967, %v967
      %v1032 = vpack.c.b16 %v968, %v968
      %v1033 = vpack.c.b16 %v969, %v969
      %v1034 = vpack.c.b16 %v970, %v970
      %v1035 = vpack.c.b16 %v971, %v971
      %v1036 = vpack.c.b16 %v972, %v972
      %v1037 = vpack.c.b16 %v973, %v973
      %v1038 = vpack.c.b16 %v974, %v974
      %v1039 = vpack.c.b16 %v975, %v975
      %v1040 = vpack.c.b16 %v976, %v976
      %v1041 = vpack.c.b16 %v977, %v977
      %v1042 = vpack.c.b16 %v978, %v978
      %v1043 = vpack.c.b16 %v979, %v979
      %v1044 = vpack.c.b16 %v980, %v980
      %v1045 = vpack.c.b16 %v981, %v981
      %v1046 = vpack.c.b16 %v982, %v982
      %1111 = vst [vmem:[%s172] sm:$0xf] %v983
      %1112 = vst [vmem:[%s172 + $0x4] sm:$0xf] %v984
      %1113 = vst [vmem:[%s172 + $0x8] sm:$0xf] %v985
      %1114 = vst [vmem:[%s172 + $0xc] sm:$0xf] %v986
      %1115 = vst [vmem:[%s172 + $0x10] sm:$0xf] %v987
      %1116 = vst [vmem:[%s172 + $0x14] sm:$0xf] %v988
      %1117 = vst [vmem:[%s172 + $0x18] sm:$0xf] %v989
      %1118 = vst [vmem:[%s172 + $0x1c] sm:$0xf] %v990
      %1119 = vst [vmem:[%s172 + $0x20] sm:$0xf] %v991
      %1120 = vst [vmem:[%s172 + $0x24] sm:$0xf] %v992
      %1121 = vst [vmem:[%s172 + $0x28] sm:$0xf] %v993
      %1122 = vst [vmem:[%s172 + $0x2c] sm:$0xf] %v994
      %1123 = vst [vmem:[%s172 + $0x30] sm:$0xf] %v995
      %1124 = vst [vmem:[%s172 + $0x34] sm:$0xf] %v996
      %1125 = vst [vmem:[%s172 + $0x38] sm:$0xf] %v997
      %1126 = vst [vmem:[%s172 + $0x3c] sm:$0xf] %v998
      %1127 = vst [vmem:[%s172 + $0x40] sm:$0xf] %v999
      %1128 = vst [vmem:[%s172 + $0x44] sm:$0xf] %v1000
      %1129 = vst [vmem:[%s172 + $0x48] sm:$0xf] %v1001
      %1130 = vst [vmem:[%s172 + $0x4c] sm:$0xf] %v1002
      %1131 = vst [vmem:[%s172 + $0x50] sm:$0xf] %v1003
      %1132 = vst [vmem:[%s172 + $0x54] sm:$0xf] %v1004
      %1133 = vst [vmem:[%s172 + $0x58] sm:$0xf] %v1005
      %1134 = vst [vmem:[%s172 + $0x5c] sm:$0xf] %v1006
      %1135 = vst [vmem:[%s172 + $0x60] sm:$0xf] %v1007
      %1136 = vst [vmem:[%s172 + $0x64] sm:$0xf] %v1008
      %1137 = vst [vmem:[%s172 + $0x68] sm:$0xf] %v1009
      %1138 = vst [vmem:[%s172 + $0x6c] sm:$0xf] %v1010
      %1139 = vst [vmem:[%s172 + $0x70] sm:$0xf] %v1011
      %1140 = vst [vmem:[%s172 + $0x74] sm:$0xf] %v1012
      %1141 = vst [vmem:[%s172 + $0x78] sm:$0xf] %v1013
      %1142 = vst [vmem:[%s172 + $0x7c] sm:$0xf] %v1014
      %1143 = vst [vmem:[%s172 + $0x80] sm:$0xf] %v1015
      %1144 = vst [vmem:[%s172 + $0x84] sm:$0xf] %v1016
      %1145 = vst [vmem:[%s172 + $0x88] sm:$0xf] %v1017
      %1146 = vst [vmem:[%s172 + $0x8c] sm:$0xf] %v1018
      %1147 = vst [vmem:[%s172 + $0x90] sm:$0xf] %v1019
      %1148 = vst [vmem:[%s172 + $0x94] sm:$0xf] %v1020
      %1149 = vst [vmem:[%s172 + $0x98] sm:$0xf] %v1021
      %1150 = vst [vmem:[%s172 + $0x9c] sm:$0xf] %v1022
      %1151 = vst [vmem:[%s172 + $0xa0] sm:$0xf] %v1023
      %1152 = vst [vmem:[%s172 + $0xa4] sm:$0xf] %v1024
      %1153 = vst [vmem:[%s172 + $0xa8] sm:$0xf] %v1025
      %1154 = vst [vmem:[%s172 + $0xac] sm:$0xf] %v1026
      %1155 = vst [vmem:[%s172 + $0xb0] sm:$0xf] %v1027
      %1156 = vst [vmem:[%s172 + $0xb4] sm:$0xf] %v1028
      %1157 = vst [vmem:[%s172 + $0xb8] sm:$0xf] %v1029
      %1158 = vst [vmem:[%s172 + $0xbc] sm:$0xf] %v1030
      %1159 = vst [vmem:[%s172 + $0xc0] sm:$0xf] %v1031
      %1160 = vst [vmem:[%s172 + $0xc4] sm:$0xf] %v1032
      %1161 = vst [vmem:[%s172 + $0xc8] sm:$0xf] %v1033
      %1162 = vst [vmem:[%s172 + $0xcc] sm:$0xf] %v1034
      %1163 = vst [vmem:[%s172 + $0xd0] sm:$0xf] %v1035
      %1164 = vst [vmem:[%s172 + $0xd4] sm:$0xf] %v1036
      %1165 = vst [vmem:[%s172 + $0xd8] sm:$0xf] %v1037
      %1166 = vst [vmem:[%s172 + $0xdc] sm:$0xf] %v1038
      %1167 = vst [vmem:[%s172 + $0xe0] sm:$0xf] %v1039
      %1168 = vst [vmem:[%s172 + $0xe4] sm:$0xf] %v1040
      %1169 = vst [vmem:[%s172 + $0xe8] sm:$0xf] %v1041
      %1170 = vst [vmem:[%s172 + $0xec] sm:$0xf] %v1042
      %1171 = vst [vmem:[%s172 + $0xf0] sm:$0xf] %v1043
      %1172 = vst [vmem:[%s172 + $0xf4] sm:$0xf] %v1044
      %1173 = vst [vmem:[%s172 + $0xf8] sm:$0xf] %v1045
      %1174 = vst [vmem:[%s172 + $0xfc] sm:$0xf] %v1046
      %s1175 = smul.u32 64, %s14
      %p1176 = scmp.lt.s32.totalorder %s1175, 255
      %s1177 = scalar_select %p1176, %s1175, 255
      %s1178 = smul.addr %s1177, 4
      %s1179 = scalar_lea.vmem %s3, %s1178
      // Predicated region
      $region33: #{forward.5} parent=31 // pred_check
        %p1180 = pneg %p100
      $region34: #{forward.5} parent=31 // pred_check_branch
        %1182 = sbr.rel (%p1180) target = $region36
      $region35: #{forward.5} parent=31 // pred_region
        %s1183 = smul.u32 64, %s14
      $region36: #{forward.5} parent=31 // pred_fallthru
        _
    $region32: #{forward.5} parent=5 // pred_fallthru
      _
    %p1184 = scmp.le.s32.totalorder 2, %s9
    // Predicated region
    $region37: #{forward.5} parent=5 // pred_check
      %p1185 = pneg %p1184
    $region38: #{forward.5} parent=5 // pred_check_branch
      %1187 = sbr.rel (%p1185) target = $region40
    $region39: #{forward.5} parent=5 // pred_region
      %s1188 = ssub.s32 %s9, 2
      // Predicated region
      $region41: #{forward.5} parent=39 // pred_check
        %p1189 = pneg %p106
      $region42: #{forward.5} parent=39 // pred_check_branch
        %1191 = sbr.rel (%p1189) target = $region44
      $region43: #{forward.5} parent=39 // pred_region
        %s1192 = smul.u32 64, %s15
        %p1193 = scmp.lt.s32.totalorder %s1192, 255
        %s1194 = scalar_select %p1193, %s1192, 255
        %s1195 = smul.addr %s1194, 4
        %s1196 = scalar_lea.vmem %s3, %s1195
      $region44: #{forward.5} parent=39 // pred_fallthru
        _
    $region40: #{forward.5} parent=5 // pred_fallthru
      _
  $region6: #{forward.5} parent=0 // loop_footer
    %s13 = sadd.s32 1, %s9
  $region7: #{forward.5} parent=0 // loop_footer_branch
    %8 = sbr.rel target = $region3
  $region8: #{forward.5} parent=0 // loop_exit
    _

// kernel: forward.6
$region0: #{forward.6}
  #allocation0 [shape = 'u32[]', space=smem, size = 0x4, offset = 0x4, fixed_abs, tag = 'smem constant byte address 0x4 - core index']
  #allocation1 [shape = 'u32[144,128]{1,0:T(1,128)}', space=vmem, size = 0x12000, scoped, tag = 'internal scratch']
  %s0 = inlined_call_operand.vmem [shape: bf16[512,128], index: 0, kind: input, shape index: {}]
  %s1 = inlined_call_operand.vmem [shape: bf16[128,128], index: 1, kind: input, shape index: {}]
  %s2 = inlined_call_operand.vmem [shape: f32[1,128], index: 2, kind: input, shape index: {}]
  %s3 = inlined_call_operand.vmem [shape: bf16[512,128], index: 3, kind: output, shape index: {}]
  %s4 = sld [smem:[#allocation0]]
  $region45: #{forward.6} parent=0
    _
  %s6 = ssub.s32 1, %s4
  %s7 = scalar_select 0, %s6, %s4
  loop: start=0, step=1, limit=4
  $region2: #{forward.6} parent=0 // loop_pre_header
    _
  $region3: #{forward.6} parent=0 // loop_header
    %s9 = sphi 0, %s13
    %p10 = scmp.ge.s32.totalorder %s9, 4
    %s19 = sphi 0, %s21
    %s22 = sphi 0, %s19
    %s23 = sphi 0, %s22
    %s39 = sphi 0, %s23
    %s43 = sphi 0, %s43
    %s45 = sphi 0, %s43
    %s46 = sphi 0, %s45
    %s60 = sphi 0, %s46
    %s64 = sphi 0, %s64
    %s66 = sphi 0, %s64
    %s67 = sphi 0, %s66
    %s81 = sphi 0, %s67
    %s87 = sphi 0, %s89
    %s90 = sphi 0, %s87
    %s91 = sphi 0, %s90
    %s107 = sphi 0, %s91
  $region4: #{forward.6} parent=0 // loop_header_branch
    %12 = sbr.rel (%p10) target = $region8
  $region5: #{forward.6} parent=0 // loop_body
    %s14 = ssub.s32 %s9, 1
    %s15 = ssub.s32 %s9, 2
    %s16 = sadd.s32 %s9, 1
    %s17 = ssub.s32 %s9, %s16
    %p18 = scmp.eq.s32.totalorder %s17, 0
    %s20 = sadd.s32 %s19, 1
    %s21 = scalar_select %p18, %s19, %s20
    %p24 = pneg %p18
    %p25 = scmp.eq.s32.totalorder %s9, 1
    %p26 = por %p24, %p25
    %p27 = scmp.ne.s32.totalorder %s19, %s22
    %p28 = scmp.eq.s32.totalorder %s9, 0
    %p29 = por %p27, %p28
    %p30 = scmp.ne.s32.totalorder %s19, %s22
    %p31 = scmp.eq.s32.totalorder %s14, 1
    %p32 = por %p30, %p31
    %p33 = scmp.ne.s32.totalorder %s22, %s23
    %p34 = scmp.eq.s32.totalorder %s14, 0
    %p35 = por %p33, %p34
    %p36 = scmp.ne.s32.totalorder %s22, %s23
    %p37 = scmp.eq.s32.totalorder %s15, 1
    %p38 = por %p36, %p37
    %p40 = scmp.ne.s32.totalorder %s23, %s39
    %p41 = scmp.eq.s32.totalorder %s15, 0
    %p42 = por %p40, %p41
    %s44 = sadd.s32 %s43, 1
    %p47 = scmp.eq.s32.totalorder %s9, 1
    %p48 = scmp.ne.s32.totalorder %s43, %s45
    %p49 = scmp.eq.s32.totalorder %s9, 0
    %p50 = por %p48, %p49
    %p51 = scmp.ne.s32.totalorder %s43, %s45
    %p52 = scmp.eq.s32.totalorder %s14, 1
    %p53 = por %p51, %p52
    %p54 = scmp.ne.s32.totalorder %s45, %s46
    %p55 = scmp.eq.s32.totalorder %s14, 0
    %p56 = por %p54, %p55
    %p57 = scmp.ne.s32.totalorder %s45, %s46
    %p58 = scmp.eq.s32.totalorder %s15, 1
    %p59 = por %p57, %p58
    %p61 = scmp.ne.s32.totalorder %s46, %s60
    %p62 = scmp.eq.s32.totalorder %s15, 0
    %p63 = por %p61, %p62
    %s65 = sadd.s32 %s64, 1
    %p68 = scmp.eq.s32.totalorder %s9, 1
    %p69 = scmp.ne.s32.totalorder %s64, %s66
    %p70 = scmp.eq.s32.totalorder %s9, 0
    %p71 = por %p69, %p70
    %p72 = scmp.ne.s32.totalorder %s64, %s66
    %p73 = scmp.eq.s32.totalorder %s14, 1
    %p74 = por %p72, %p73
    %p75 = scmp.ne.s32.totalorder %s66, %s67
    %p76 = scmp.eq.s32.totalorder %s14, 0
    %p77 = por %p75, %p76
    %p78 = scmp.ne.s32.totalorder %s66, %s67
    %p79 = scmp.eq.s32.totalorder %s15, 1
    %p80 = por %p78, %p79
    %p82 = scmp.ne.s32.totalorder %s67, %s81
    %p83 = scmp.eq.s32.totalorder %s15, 0
    %p84 = por %p82, %p83
    %s85 = ssub.s32 %s9, %s16
    %p86 = scmp.eq.s32.totalorder %s85, 0
    %s88 = sadd.s32 %s87, 1
    %s89 = scalar_select %p86, %s87, %s88
    %p92 = pneg %p86
    %p93 = scmp.eq.s32.totalorder %s9, 1
    %p94 = por %p92, %p93
    %p95 = scmp.ne.s32.totalorder %s87, %s90
    %p96 = scmp.eq.s32.totalorder %s9, 0
    %p97 = por %p95, %p96
    %p98 = scmp.ne.s32.totalorder %s87, %s90
    %p99 = scmp.eq.s32.totalorder %s14, 1
    %p100 = por %p98, %p99
    %p101 = scmp.ne.s32.totalorder %s90, %s91
    %p102 = scmp.eq.s32.totalorder %s14, 0
    %p103 = por %p101, %p102
    %p104 = scmp.ne.s32.totalorder %s90, %s91
    %p105 = scmp.eq.s32.totalorder %s15, 1
    %p106 = por %p104, %p105
    %p108 = scmp.ne.s32.totalorder %s91, %s107
    %p109 = scmp.eq.s32.totalorder %s15, 0
    %p110 = por %p108, %p109
    %p111 = scmp.le.s32.totalorder 1, %s9
    %p112 = scmp.lt.s32.totalorder %s9, 3
    %p113 = pnand %p111, %p112
    %p114 = pneg %p113
    // Predicated region
    $region9: #{forward.6} parent=5 // pred_check
      _
    $region10: #{forward.6} parent=5 // pred_check_branch
      %116 = sbr.rel (%p113) target = $region12
    $region11: #{forward.6} parent=5 // pred_region
      %s117 = ssub.s32 %s9, 1
      // Predicated region
      $region13: #{forward.6} parent=11 // pred_check
        %p118 = pneg %p56
      $region14: #{forward.6} parent=11 // pred_check_branch
        %120 = sbr.rel (%p118) target = $region16
      $region15: #{forward.6} parent=11 // pred_region
        _
      $region16: #{forward.6} parent=11 // pred_fallthru
        _
      // Predicated region
      $region17: #{forward.6} parent=11 // pred_check
        %p121 = pneg %p77
      $region18: #{forward.6} parent=11 // pred_check_branch
        %123 = sbr.rel (%p121) target = $region20
      $region19: #{forward.6} parent=11 // pred_region
        _
      $region20: #{forward.6} parent=11 // pred_fallthru
        _
    $region12: #{forward.6} parent=5 // pred_fallthru
      _
    %p124 = scmp.lt.s32.totalorder %s9, 2
    // Predicated region
    $region21: #{forward.6} parent=5 // pred_check
      %p125 = pneg %p124
    $region22: #{forward.6} parent=5 // pred_check_branch
      %127 = sbr.rel (%p125) target = $region24
    $region23: #{forward.6} parent=5 // pred_region
      // Predicated region
      $region25: #{forward.6} parent=23 // pred_check
        %p128 = pneg %p29
      $region26: #{forward.6} parent=23 // pred_check_branch
        %130 = sbr.rel (%p128) target = $region28
      $region27: #{forward.6} parent=23 // pred_region
        %s131 = smul.u32 32, %s9
        %p132 = scmp.lt.s32.totalorder %s131, 63
        %s133 = scalar_select %p132, %s131, 63
        %s134 = smul.addr %s133, 4
        %s135 = scalar_lea.vmem %s0, %s134
        %s136 = smul.u32 32, %s9
      $region28: #{forward.6} parent=23 // pred_fallthru
        _
    $region24: #{forward.6} parent=5 // pred_fallthru
      _
    %p137 = scmp.le.s32.totalorder 1, %s9
    %p138 = scmp.lt.s32.totalorder %s9, 3
    %p139 = pnand %p137, %p138
    %p140 = pneg %p139
    // Predicated region
    $region29: #{forward.6} parent=5 // pred_check
      _
    $region30: #{forward.6} parent=5 // pred_check_branch
      %142 = sbr.rel (%p139) target = $region32
    $region31: #{forward.6} parent=5 // pred_region
      %s143 = ssub.s32 %s9, 1
      %s144 = smul.u32 32, %s14
      %p145 = scmp.lt.s32.totalorder %s144, 63
      %s146 = scalar_select %p145, %s144, 63
      %s147 = smul.addr %s146, 4
      %s148 = scalar_lea.vmem %s0, %s147
      %p149 = pneg %p35
      %p150 = pneg %p32
      %p151 = pneg %p56
      %p152 = pneg %p53
      %p153 = pneg %p77
      %p154 = pneg %p74
      %p155 = pneg %p103
      %p156 = pneg %p100
      %s157 = smul.u32 32, %s14
      %p158 = scmp.lt.s32.totalorder %s157, 63
      %s159 = scalar_select %p158, %s157, 63
      %s160 = smul.addr %s159, 4
      %s161 = scalar_lea.vmem %s3, %s160
      %s162 = smul.u32 32, %s14
      %p163 = scmp.lt.s32.totalorder %s162, 63
      %s164 = scalar_select %p163, %s162, 63
      %s165 = smul.addr %s164, 4
      %s166 = scalar_lea.vmem %s0, %s165
      %s167 = smul.u32 32, %s14
      %s168 = smul.u32 32, %s14
      %p169 = scmp.lt.s32.totalorder %s168, 63
      %s170 = scalar_select %p169, %s168, 63
      %s171 = smul.addr %s170, 4
      %s172 = scalar_lea.vmem %s3, %s171
      %s173 = smul.u32 32, %s14
      %v175 = vld [vmem:[%s166] sm:$0xf]
      %v176 = vld [vmem:[%s166 + $0x4] sm:$0xf]
      %v177 = vld [vmem:[%s166 + $0x8] sm:$0xf]
      %v178 = vld [vmem:[%s166 + $0xc] sm:$0xf]
      %v179 = vld [vmem:[%s166 + $0x10] sm:$0xf]
      %v180 = vld [vmem:[%s166 + $0x14] sm:$0xf]
      %v181 = vld [vmem:[%s166 + $0x18] sm:$0xf]
      %v182 = vld [vmem:[%s166 + $0x1c] sm:$0xf]
      %v183 = vld [vmem:[%s166 + $0x20] sm:$0xf]
      %v184 = vld [vmem:[%s166 + $0x24] sm:$0xf]
      %v185 = vld [vmem:[%s166 + $0x28] sm:$0xf]
      %v186 = vld [vmem:[%s166 + $0x2c] sm:$0xf]
      %v187 = vld [vmem:[%s166 + $0x30] sm:$0xf]
      %v188 = vld [vmem:[%s166 + $0x34] sm:$0xf]
      %v189 = vld [vmem:[%s166 + $0x38] sm:$0xf]
      %v190 = vld [vmem:[%s166 + $0x3c] sm:$0xf]
      %v191 = vld [vmem:[%s166 + $0x40] sm:$0xf]
      %v192 = vld [vmem:[%s166 + $0x44] sm:$0xf]
      %v193 = vld [vmem:[%s166 + $0x48] sm:$0xf]
      %v194 = vld [vmem:[%s166 + $0x4c] sm:$0xf]
      %v195 = vld [vmem:[%s166 + $0x50] sm:$0xf]
      %v196 = vld [vmem:[%s166 + $0x54] sm:$0xf]
      %v197 = vld [vmem:[%s166 + $0x58] sm:$0xf]
      %v198 = vld [vmem:[%s166 + $0x5c] sm:$0xf]
      %v199 = vld [vmem:[%s166 + $0x60] sm:$0xf]
      %v200 = vld [vmem:[%s166 + $0x64] sm:$0xf]
      %v201 = vld [vmem:[%s166 + $0x68] sm:$0xf]
      %v202 = vld [vmem:[%s166 + $0x6c] sm:$0xf]
      %v203 = vld [vmem:[%s166 + $0x70] sm:$0xf]
      %v204 = vld [vmem:[%s166 + $0x74] sm:$0xf]
      %v205 = vld [vmem:[%s166 + $0x78] sm:$0xf]
      %v206 = vld [vmem:[%s166 + $0x7c] sm:$0xf]
      %v207 = vld [vmem:[%s1] sm:$0xf]
      %v208 = vld [vmem:[%s1 + $0x4] sm:$0xf]
      %v209 = vld [vmem:[%s1 + $0x8] sm:$0xf]
      %v210 = vld [vmem:[%s1 + $0xc] sm:$0xf]
      %v211 = vld [vmem:[%s1 + $0x10] sm:$0xf]
      %v212 = vld [vmem:[%s1 + $0x14] sm:$0xf]
      %v213 = vld [vmem:[%s1 + $0x18] sm:$0xf]
      %v214 = vld [vmem:[%s1 + $0x1c] sm:$0xf]
      %v215 = vld [vmem:[%s1 + $0x20] sm:$0xf]
      %v216 = vld [vmem:[%s1 + $0x24] sm:$0xf]
      %v217 = vld [vmem:[%s1 + $0x28] sm:$0xf]
      %v218 = vld [vmem:[%s1 + $0x2c] sm:$0xf]
      %v219 = vld [vmem:[%s1 + $0x30] sm:$0xf]
      %v220 = vld [vmem:[%s1 + $0x34] sm:$0xf]
      %v221 = vld [vmem:[%s1 + $0x38] sm:$0xf]
      %v222 = vld [vmem:[%s1 + $0x3c] sm:$0xf]
      %v223 = vld [vmem:[%s2] sm:$0x1]
      %v225 = vlaneseq
      %v226 = vshrl.u32 %v225, 7
      %v227 = vsub.s32 0, %v226
      %v228 = vrot.slane %v223, %v227
      %v262 = vunpack.c.l.b16 %v175
      %v263 = vunpack.c.l.b16 %v176
      %v264 = vunpack.c.l.b16 %v177
      %v265 = vunpack.c.l.b16 %v178
      %v266 = vunpack.c.l.b16 %v179
      %v267 = vunpack.c.l.b16 %v180
      %v268 = vunpack.c.l.b16 %v181
      %v269 = vunpack.c.l.b16 %v182
      %v270 = vunpack.c.l.b16 %v183
      %v271 = vunpack.c.l.b16 %v184
      %v272 = vunpack.c.l.b16 %v185
      %v273 = vunpack.c.l.b16 %v186
      %v274 = vunpack.c.l.b16 %v187
      %v275 = vunpack.c.l.b16 %v188
      %v276 = vunpack.c.l.b16 %v189
      %v277 = vunpack.c.l.b16 %v190
      %v278 = vunpack.c.l.b16 %v191
      %v279 = vunpack.c.l.b16 %v192
      %v280 = vunpack.c.l.b16 %v193
      %v281 = vunpack.c.l.b16 %v194
      %v282 = vunpack.c.l.b16 %v195
      %v283 = vunpack.c.l.b16 %v196
      %v284 = vunpack.c.l.b16 %v197
      %v285 = vunpack.c.l.b16 %v198
      %v286 = vunpack.c.l.b16 %v199
      %v287 = vunpack.c.l.b16 %v200
      %v288 = vunpack.c.l.b16 %v201
      %v289 = vunpack.c.l.b16 %v202
      %v290 = vunpack.c.l.b16 %v203
      %v291 = vunpack.c.l.b16 %v204
      %v292 = vunpack.c.l.b16 %v205
      %v293 = vunpack.c.l.b16 %v206
      %v294 = vpack.c.b16 %v263, %v262
      %v295 = vpack.c.b16 %v265, %v264
      %v296 = vpack.c.b16 %v267, %v266
      %v297 = vpack.c.b16 %v269, %v268
      %v298 = vpack.c.b16 %v271, %v270
      %v299 = vpack.c.b16 %v273, %v272
      %v300 = vpack.c.b16 %v275, %v274
      %v301 = vpack.c.b16 %v277, %v276
      %v302 = vpack.c.b16 %v279, %v278
      %v303 = vpack.c.b16 %v281, %v280
      %v304 = vpack.c.b16 %v283, %v282
      %v305 = vpack.c.b16 %v285, %v284
      %v306 = vpack.c.b16 %v287, %v286
      %v307 = vpack.c.b16 %v289, %v288
      %v308 = vpack.c.b16 %v291, %v290
      %v309 = vpack.c.b16 %v293, %v292
      %v342 = vunpack.c.l.b16 %v207
      %v343 = vunpack.c.l.b16 %v208
      %v344 = vunpack.c.l.b16 %v209
      %v345 = vunpack.c.l.b16 %v210
      %v346 = vunpack.c.l.b16 %v211
      %v347 = vunpack.c.l.b16 %v212
      %v348 = vunpack.c.l.b16 %v213
      %v349 = vunpack.c.l.b16 %v214
      %v350 = vunpack.c.l.b16 %v215
      %v351 = vunpack.c.l.b16 %v216
      %v352 = vunpack.c.l.b16 %v217
      %v353 = vunpack.c.l.b16 %v218
      %v354 = vunpack.c.l.b16 %v219
      %v355 = vunpack.c.l.b16 %v220
      %v356 = vunpack.c.l.b16 %v221
      %v357 = vunpack.c.l.b16 %v222
      %v358 = vpack.c.b16 %v343, %v342
      %v359 = vpack.c.b16 %v345, %v344
      %v360 = vpack.c.b16 %v347, %v346
      %v361 = vpack.c.b16 %v349, %v348
      %v362 = vpack.c.b16 %v351, %v350
      %v363 = vpack.c.b16 %v353, %v352
      %v364 = vpack.c.b16 %v355, %v354
      %v365 = vpack.c.b16 %v357, %v356
      %374 = vmatprep.subr.bf16.mxu0 0
      %375 = vmatpush1.bf16.msra.mxu0 %v365
      %376 = vmatprep.subr.bf16.mxu0 0
      %377 = vmatpush1.bf16.msra.mxu0 %v364
      %378 = vmatprep.subr.bf16.mxu0 0
      %379 = vmatpush1.bf16.msra.mxu0 %v363
      %380 = vmatprep.subr.bf16.mxu0 0
      %381 = vmatpush1.bf16.msra.mxu0 %v362
      %382 = vmatprep.subr.bf16.mxu0 0
      %383 = vmatpush1.bf16.msra.mxu0 %v361
      %384 = vmatprep.subr.bf16.mxu0 0
      %385 = vmatpush1.bf16.msra.mxu0 %v360
      %386 = vmatprep.subr.bf16.mxu0 0
      %387 = vmatpush1.bf16.msra.mxu0 %v359
      %388 = vmatprep.subr.bf16.mxu0 0
      %389 = vmatpush1.bf16.msra.mxu0 %v358
      %390 = vmatprep.subr.bf16.mxu0 0
      %391 = vmatpush2.bf16.msra.mxu0 0
      %392 = vmatprep.subr.bf16.mxu0 0
      %393 = vmatpush2.bf16.msra.mxu0 0
      %394 = vmatprep.subr.bf16.mxu0 0
      %395 = vmatpush2.bf16.msra.mxu0 0
      %396 = vmatprep.subr.bf16.mxu0 0
      %397 = vmatpush2.bf16.msra.mxu0 0
      %398 = vmatprep.subr.bf16.mxu0 0
      %399 = vmatpush2.bf16.msra.mxu0 0
      %400 = vmatprep.subr.bf16.mxu0 0
      %401 = vmatpush2.bf16.msra.mxu0 0
      %402 = vmatprep.subr.bf16.mxu0 0
      %403 = vmatpush2.bf16.msra.mxu0 0
      %404 = vmatprep.subr.bf16.mxu0 0
      %405 = vmatpush2.bf16.msra.mxu0 0
      %406 = vmatprep.mubr.bf16.mxu0 0
      %407 = vmatmul.mubr.bf16.gmra.mxu0 %v294
      %v408 = vpop.f32.mrf.mxu0
      %v409 = vadd.f32 %v228, %v408
      %v410 = vpop.f32.mrf.mxu0
      %v411 = vpop.f32.mrf.mxu0
      %v412 = vadd.f32 %v228, %v411
      %v413 = vpop.f32.mrf.mxu0
      %414 = vmatprep.mubr.bf16.mxu0 0
      %415 = vmatmul.mubr.bf16.gmra.mxu0 %v295
      %v416 = vpop.f32.mrf.mxu0
      %v417 = vadd.f32 %v228, %v416
      %v418 = vpop.f32.mrf.mxu0
      %v419 = vpop.f32.mrf.mxu0
      %v420 = vadd.f32 %v228, %v419
      %v421 = vpop.f32.mrf.mxu0
      %422 = vmatprep.mubr.bf16.mxu0 0
      %423 = vmatmul.mubr.bf16.gmra.mxu0 %v296
      %v424 = vpop.f32.mrf.mxu0
      %v425 = vadd.f32 %v228, %v424
      %v426 = vpop.f32.mrf.mxu0
      %v427 = vpop.f32.mrf.mxu0
      %v428 = vadd.f32 %v228, %v427
      %v429 = vpop.f32.mrf.mxu0
      %430 = vmatprep.mubr.bf16.mxu0 0
      %431 = vmatmul.mubr.bf16.gmra.mxu0 %v297
      %v432 = vpop.f32.mrf.mxu0
      %v433 = vadd.f32 %v228, %v432
      %v434 = vpop.f32.mrf.mxu0
      %v435 = vpop.f32.mrf.mxu0
      %v436 = vadd.f32 %v228, %v435
      %v437 = vpop.f32.mrf.mxu0
      %438 = vmatprep.mubr.bf16.mxu0 0
      %439 = vmatmul.mubr.bf16.gmra.mxu0 %v298
      %v440 = vpop.f32.mrf.mxu0
      %v441 = vadd.f32 %v228, %v440
      %v442 = vpop.f32.mrf.mxu0
      %v443 = vpop.f32.mrf.mxu0
      %v444 = vadd.f32 %v228, %v443
      %v445 = vpop.f32.mrf.mxu0
      %446 = vmatprep.mubr.bf16.mxu0 0
      %447 = vmatmul.mubr.bf16.gmra.mxu0 %v299
      %v448 = vpop.f32.mrf.mxu0
      %v449 = vadd.f32 %v228, %v448
      %v450 = vpop.f32.mrf.mxu0
      %v451 = vpop.f32.mrf.mxu0
      %v452 = vadd.f32 %v228, %v451
      %v453 = vpop.f32.mrf.mxu0
      %454 = vmatprep.mubr.bf16.mxu0 0
      %455 = vmatmul.mubr.bf16.gmra.mxu0 %v300
      %v456 = vpop.f32.mrf.mxu0
      %v457 = vadd.f32 %v228, %v456
      %v458 = vpop.f32.mrf.mxu0
      %v459 = vpop.f32.mrf.mxu0
      %v460 = vadd.f32 %v228, %v459
      %v461 = vpop.f32.mrf.mxu0
      %462 = vmatprep.mubr.bf16.mxu0 0
      %463 = vmatmul.mubr.bf16.gmra.mxu0 %v301
      %v464 = vpop.f32.mrf.mxu0
      %v465 = vadd.f32 %v228, %v464
      %v466 = vpop.f32.mrf.mxu0
      %v467 = vpop.f32.mrf.mxu0
      %v468 = vadd.f32 %v228, %v467
      %v469 = vpop.f32.mrf.mxu0
      %470 = vmatprep.mubr.bf16.mxu0 0
      %471 = vmatmul.mubr.bf16.gmra.mxu0 %v302
      %v472 = vpop.f32.mrf.mxu0
      %v473 = vadd.f32 %v228, %v472
      %v474 = vpop.f32.mrf.mxu0
      %v475 = vpop.f32.mrf.mxu0
      %v476 = vadd.f32 %v228, %v475
      %v477 = vpop.f32.mrf.mxu0
      %478 = vmatprep.mubr.bf16.mxu0 0
      %479 = vmatmul.mubr.bf16.gmra.mxu0 %v303
      %v480 = vpop.f32.mrf.mxu0
      %v481 = vadd.f32 %v228, %v480
      %v482 = vpop.f32.mrf.mxu0
      %v483 = vpop.f32.mrf.mxu0
      %v484 = vadd.f32 %v228, %v483
      %v485 = vpop.f32.mrf.mxu0
      %486 = vmatprep.mubr.bf16.mxu0 0
      %487 = vmatmul.mubr.bf16.gmra.mxu0 %v304
      %v488 = vpop.f32.mrf.mxu0
      %v489 = vadd.f32 %v228, %v488
      %v490 = vpop.f32.mrf.mxu0
      %v491 = vpop.f32.mrf.mxu0
      %v492 = vadd.f32 %v228, %v491
      %v493 = vpop.f32.mrf.mxu0
      %494 = vmatprep.mubr.bf16.mxu0 0
      %495 = vmatmul.mubr.bf16.gmra.mxu0 %v305
      %v496 = vpop.f32.mrf.mxu0
      %v497 = vadd.f32 %v228, %v496
      %v498 = vpop.f32.mrf.mxu0
      %v499 = vpop.f32.mrf.mxu0
      %v500 = vadd.f32 %v228, %v499
      %v501 = vpop.f32.mrf.mxu0
      %502 = vmatprep.mubr.bf16.mxu0 0
      %503 = vmatmul.mubr.bf16.gmra.mxu0 %v306
      %v504 = vpop.f32.mrf.mxu0
      %v505 = vadd.f32 %v228, %v504
      %v506 = vpop.f32.mrf.mxu0
      %v507 = vpop.f32.mrf.mxu0
      %v508 = vadd.f32 %v228, %v507
      %v509 = vpop.f32.mrf.mxu0
      %510 = vmatprep.mubr.bf16.mxu0 0
      %511 = vmatmul.mubr.bf16.gmra.mxu0 %v307
      %v512 = vpop.f32.mrf.mxu0
      %v513 = vadd.f32 %v228, %v512
      %v514 = vpop.f32.mrf.mxu0
      %v515 = vpop.f32.mrf.mxu0
      %v516 = vadd.f32 %v228, %v515
      %v517 = vpop.f32.mrf.mxu0
      %518 = vmatprep.mubr.bf16.mxu0 0
      %519 = vmatmul.mubr.bf16.gmra.mxu0 %v308
      %v520 = vpop.f32.mrf.mxu0
      %v521 = vadd.f32 %v228, %v520
      %v522 = vpop.f32.mrf.mxu0
      %v523 = vpop.f32.mrf.mxu0
      %v524 = vadd.f32 %v228, %v523
      %v525 = vpop.f32.mrf.mxu0
      %526 = vmatprep.mubr.bf16.mxu0 0
      %527 = vmatmul.mubr.bf16.gmra.mxu0 %v309
      %v528 = vpop.f32.mrf.mxu0
      %v529 = vadd.f32 %v228, %v528
      %v530 = vpop.f32.mrf.mxu0
      %v531 = vpop.f32.mrf.mxu0
      %v532 = vadd.f32 %v228, %v531
      %v533 = vpop.f32.mrf.mxu0
      %534 = vdwg.mxu0
      %v535 = vmax.f32 %v409, 0.0
      %v536 = vmax.f32 %v412, 0.0
      %v537 = vmax.f32 %v417, 0.0
      %v538 = vmax.f32 %v420, 0.0
      %v539 = vmax.f32 %v425, 0.0
      %v540 = vmax.f32 %v428, 0.0
      %v541 = vmax.f32 %v433, 0.0
      %v542 = vmax.f32 %v436, 0.0
      %v543 = vmax.f32 %v441, 0.0
      %v544 = vmax.f32 %v444, 0.0
      %v545 = vmax.f32 %v449, 0.0
      %v546 = vmax.f32 %v452, 0.0
      %v547 = vmax.f32 %v457, 0.0
      %v548 = vmax.f32 %v460, 0.0
      %v549 = vmax.f32 %v465, 0.0
      %v550 = vmax.f32 %v468, 0.0
      %v551 = vmax.f32 %v473, 0.0
      %v552 = vmax.f32 %v476, 0.0
      %v553 = vmax.f32 %v481, 0.0
      %v554 = vmax.f32 %v484, 0.0
      %v555 = vmax.f32 %v489, 0.0
      %v556 = vmax.f32 %v492, 0.0
      %v557 = vmax.f32 %v497, 0.0
      %v558 = vmax.f32 %v500, 0.0
      %v559 = vmax.f32 %v505, 0.0
      %v560 = vmax.f32 %v508, 0.0
      %v561 = vmax.f32 %v513, 0.0
      %v562 = vmax.f32 %v516, 0.0
      %v563 = vmax.f32 %v521, 0.0
      %v564 = vmax.f32 %v524, 0.0
      %v565 = vmax.f32 %v529, 0.0
      %v566 = vmax.f32 %v532, 0.0
      %v567 = vpack.c.bf16 %v536, %v535
      %v568 = vpack.c.bf16 %v538, %v537
      %v569 = vpack.c.bf16 %v540, %v539
      %v570 = vpack.c.bf16 %v542, %v541
      %v571 = vpack.c.bf16 %v544, %v543
      %v572 = vpack.c.bf16 %v546, %v545
      %v573 = vpack.c.bf16 %v548, %v547
      %v574 = vpack.c.bf16 %v550, %v549
      %v575 = vpack.c.bf16 %v552, %v551
      %v576 = vpack.c.bf16 %v554, %v553
      %v577 = vpack.c.bf16 %v556, %v555
      %v578 = vpack.c.bf16 %v558, %v557
      %v579 = vpack.c.bf16 %v560, %v559
      %v580 = vpack.c.bf16 %v562, %v561
      %v581 = vpack.c.bf16 %v564, %v563
      %v582 = vpack.c.bf16 %v566, %v565
      %v599 = vunpack.c.l.b16 %v567
      %v600 = vunpack.c.h.b16 %v567
      %v601 = vunpack.c.l.b16 %v568
      %v602 = vunpack.c.h.b16 %v568
      %v603 = vunpack.c.l.b16 %v569
      %v604 = vunpack.c.h.b16 %v569
      %v605 = vunpack.c.l.b16 %v570
      %v606 = vunpack.c.h.b16 %v570
      %v607 = vunpack.c.l.b16 %v571
      %v608 = vunpack.c.h.b16 %v571
      %v609 = vunpack.c.l.b16 %v572
      %v610 = vunpack.c.h.b16 %v572
      %v611 = vunpack.c.l.b16 %v573
      %v612 = vunpack.c.h.b16 %v573
      %v613 = vunpack.c.l.b16 %v574
      %v614 = vunpack.c.h.b16 %v574
      %v615 = vunpack.c.l.b16 %v575
      %v616 = vunpack.c.h.b16 %v575
      %v617 = vunpack.c.l.b16 %v576
      %v618 = vunpack.c.h.b16 %v576
      %v619 = vunpack.c.l.b16 %v577
      %v620 = vunpack.c.h.b16 %v577
      %v621 = vunpack.c.l.b16 %v578
      %v622 = vunpack.c.h.b16 %v578
      %v623 = vunpack.c.l.b16 %v579
      %v624 = vunpack.c.h.b16 %v579
      %v625 = vunpack.c.l.b16 %v580
      %v626 = vunpack.c.h.b16 %v580
      %v627 = vunpack.c.l.b16 %v581
      %v628 = vunpack.c.h.b16 %v581
      %v629 = vunpack.c.l.b16 %v582
      %v630 = vunpack.c.h.b16 %v582
      %v631 = vpack.c.b16 %v599, %v599
      %v632 = vpack.c.b16 %v600, %v600
      %v633 = vpack.c.b16 %v601, %v601
      %v634 = vpack.c.b16 %v602, %v602
      %v635 = vpack.c.b16 %v603, %v603
      %v636 = vpack.c.b16 %v604, %v604
      %v637 = vpack.c.b16 %v605, %v605
      %v638 = vpack.c.b16 %v606, %v606
      %v639 = vpack.c.b16 %v607, %v607
      %v640 = vpack.c.b16 %v608, %v608
      %v641 = vpack.c.b16 %v609, %v609
      %v642 = vpack.c.b16 %v610, %v610
      %v643 = vpack.c.b16 %v611, %v611
      %v644 = vpack.c.b16 %v612, %v612
      %v645 = vpack.c.b16 %v613, %v613
      %v646 = vpack.c.b16 %v614, %v614
      %v647 = vpack.c.b16 %v615, %v615
      %v648 = vpack.c.b16 %v616, %v616
      %v649 = vpack.c.b16 %v617, %v617
      %v650 = vpack.c.b16 %v618, %v618
      %v651 = vpack.c.b16 %v619, %v619
      %v652 = vpack.c.b16 %v620, %v620
      %v653 = vpack.c.b16 %v621, %v621
      %v654 = vpack.c.b16 %v622, %v622
      %v655 = vpack.c.b16 %v623, %v623
      %v656 = vpack.c.b16 %v624, %v624
      %v657 = vpack.c.b16 %v625, %v625
      %v658 = vpack.c.b16 %v626, %v626
      %v659 = vpack.c.b16 %v627, %v627
      %v660 = vpack.c.b16 %v628, %v628
      %v661 = vpack.c.b16 %v629, %v629
      %v662 = vpack.c.b16 %v630, %v630
      %695 = vst [vmem:[%s172] sm:$0xf] %v631
      %696 = vst [vmem:[%s172 + $0x4] sm:$0xf] %v632
      %697 = vst [vmem:[%s172 + $0x8] sm:$0xf] %v633
      %698 = vst [vmem:[%s172 + $0xc] sm:$0xf] %v634
      %699 = vst [vmem:[%s172 + $0x10] sm:$0xf] %v635
      %700 = vst [vmem:[%s172 + $0x14] sm:$0xf] %v636
      %701 = vst [vmem:[%s172 + $0x18] sm:$0xf] %v637
      %702 = vst [vmem:[%s172 + $0x1c] sm:$0xf] %v638
      %703 = vst [vmem:[%s172 + $0x20] sm:$0xf] %v639
      %704 = vst [vmem:[%s172 + $0x24] sm:$0xf] %v640
      %705 = vst [vmem:[%s172 + $0x28] sm:$0xf] %v641
      %706 = vst [vmem:[%s172 + $0x2c] sm:$0xf] %v642
      %707 = vst [vmem:[%s172 + $0x30] sm:$0xf] %v643
      %708 = vst [vmem:[%s172 + $0x34] sm:$0xf] %v644
      %709 = vst [vmem:[%s172 + $0x38] sm:$0xf] %v645
      %710 = vst [vmem:[%s172 + $0x3c] sm:$0xf] %v646
      %711 = vst [vmem:[%s172 + $0x40] sm:$0xf] %v647
      %712 = vst [vmem:[%s172 + $0x44] sm:$0xf] %v648
      %713 = vst [vmem:[%s172 + $0x48] sm:$0xf] %v649
      %714 = vst [vmem:[%s172 + $0x4c] sm:$0xf] %v650
      %715 = vst [vmem:[%s172 + $0x50] sm:$0xf] %v651
      %716 = vst [vmem:[%s172 + $0x54] sm:$0xf] %v652
      %717 = vst [vmem:[%s172 + $0x58] sm:$0xf] %v653
      %718 = vst [vmem:[%s172 + $0x5c] sm:$0xf] %v654
      %719 = vst [vmem:[%s172 + $0x60] sm:$0xf] %v655
      %720 = vst [vmem:[%s172 + $0x64] sm:$0xf] %v656
      %721 = vst [vmem:[%s172 + $0x68] sm:$0xf] %v657
      %722 = vst [vmem:[%s172 + $0x6c] sm:$0xf] %v658
      %723 = vst [vmem:[%s172 + $0x70] sm:$0xf] %v659
      %724 = vst [vmem:[%s172 + $0x74] sm:$0xf] %v660
      %725 = vst [vmem:[%s172 + $0x78] sm:$0xf] %v661
      %726 = vst [vmem:[%s172 + $0x7c] sm:$0xf] %v662
      %s727 = smul.u32 32, %s14
      %p728 = scmp.lt.s32.totalorder %s727, 63
      %s729 = scalar_select %p728, %s727, 63
      %s730 = smul.addr %s729, 4
      %s731 = scalar_lea.vmem %s3, %s730
      // Predicated region
      $region33: #{forward.6} parent=31 // pred_check
        %p732 = pneg %p100
      $region34: #{forward.6} parent=31 // pred_check_branch
        %734 = sbr.rel (%p732) target = $region36
      $region35: #{forward.6} parent=31 // pred_region
        %s735 = smul.u32 32, %s14
      $region36: #{forward.6} parent=31 // pred_fallthru
        _
    $region32: #{forward.6} parent=5 // pred_fallthru
      _
    %p736 = scmp.le.s32.totalorder 2, %s9
    // Predicated region
    $region37: #{forward.6} parent=5 // pred_check
      %p737 = pneg %p736
    $region38: #{forward.6} parent=5 // pred_check_branch
      %739 = sbr.rel (%p737) target = $region40
    $region39: #{forward.6} parent=5 // pred_region
      %s740 = ssub.s32 %s9, 2
      // Predicated region
      $region41: #{forward.6} parent=39 // pred_check
        %p741 = pneg %p106
      $region42: #{forward.6} parent=39 // pred_check_branch
        %743 = sbr.rel (%p741) target = $region44
      $region43: #{forward.6} parent=39 // pred_region
        %s744 = smul.u32 32, %s15
        %p745 = scmp.lt.s32.totalorder %s744, 63
        %s746 = scalar_select %p745, %s744, 63
        %s747 = smul.addr %s746, 4
        %s748 = scalar_lea.vmem %s3, %s747
      $region44: #{forward.6} parent=39 // pred_fallthru
        _
    $region40: #{forward.6} parent=5 // pred_fallthru
      _
  $region6: #{forward.6} parent=0 // loop_footer
    %s13 = sadd.s32 1, %s9
  $region7: #{forward.6} parent=0 // loop_footer_branch
    %8 = sbr.rel target = $region3
  $region8: #{forward.6} parent=0 // loop_exit
    _

// kernel: forward.7
$region0: #{forward.7}
  #allocation0 [shape = 'u32[]', space=smem, size = 0x4, offset = 0x4, fixed_abs, tag = 'smem constant byte address 0x4 - core index']
  #allocation1 [shape = 'u32[144,128]{1,0:T(1,128)}', space=vmem, size = 0x12000, scoped, tag = 'internal scratch']
  %s0 = inlined_call_operand.vmem [shape: bf16[128,256], index: 0, kind: input, shape index: {}]
  %s1 = inlined_call_operand.vmem [shape: bf16[256,128], index: 1, kind: input, shape index: {}]
  %s2 = inlined_call_operand.vmem [shape: f32[1,128], index: 2, kind: input, shape index: {}]
  %s3 = inlined_call_operand.vmem [shape: bf16[128,128], index: 3, kind: output, shape index: {}]
  %s4 = sld [smem:[#allocation0]]
  $region22: #{forward.7} parent=0
    _
  %s6 = ssub.s32 1, %s4
  %s7 = scalar_select 0, %s6, %s4
  // Predicated region
  $region2: #{forward.7} parent=0 // pred_check
    _
  $region3: #{forward.7} parent=0 // pred_check_branch
    %9 = sbr.rel (0) target = $region5
  $region4: #{forward.7} parent=0 // pred_region
    _
  $region5: #{forward.7} parent=0 // pred_fallthru
    _
  // Predicated region
  $region6: #{forward.7} parent=0 // pred_check
    _
  $region7: #{forward.7} parent=0 // pred_check_branch
    %11 = sbr.rel (0) target = $region9
  $region8: #{forward.7} parent=0 // pred_region
    _
  $region9: #{forward.7} parent=0 // pred_fallthru
    _
  // Predicated region
  $region10: #{forward.7} parent=0 // pred_check
    _
  $region11: #{forward.7} parent=0 // pred_check_branch
    %13 = sbr.rel (0) target = $region13
  $region12: #{forward.7} parent=0 // pred_region
    _
  $region13: #{forward.7} parent=0 // pred_fallthru
    _
  %v15 = vld [vmem:[%s0] sm:$0xff]
  %v16 = vld [vmem:[%s0 + $0x8] sm:$0xff]
  %v17 = vld [vmem:[%s0 + $0x10] sm:$0xff]
  %v18 = vld [vmem:[%s0 + $0x18] sm:$0xff]
  %v19 = vld [vmem:[%s0 + $0x20] sm:$0xff]
  %v20 = vld [vmem:[%s0 + $0x28] sm:$0xff]
  %v21 = vld [vmem:[%s0 + $0x30] sm:$0xff]
  %v22 = vld [vmem:[%s0 + $0x38] sm:$0xff]
  %v23 = vld [vmem:[%s0 + $0x40] sm:$0xff]
  %v24 = vld [vmem:[%s0 + $0x48] sm:$0xff]
  %v25 = vld [vmem:[%s0 + $0x50] sm:$0xff]
  %v26 = vld [vmem:[%s0 + $0x58] sm:$0xff]
  %v27 = vld [vmem:[%s0 + $0x60] sm:$0xff]
  %v28 = vld [vmem:[%s0 + $0x68] sm:$0xff]
  %v29 = vld [vmem:[%s0 + $0x70] sm:$0xff]
  %v30 = vld [vmem:[%s0 + $0x78] sm:$0xff]
  %v31 = vld [vmem:[%s1] sm:$0xf]
  %v32 = vld [vmem:[%s1 + $0x4] sm:$0xf]
  %v33 = vld [vmem:[%s1 + $0x8] sm:$0xf]
  %v34 = vld [vmem:[%s1 + $0xc] sm:$0xf]
  %v35 = vld [vmem:[%s1 + $0x10] sm:$0xf]
  %v36 = vld [vmem:[%s1 + $0x14] sm:$0xf]
  %v37 = vld [vmem:[%s1 + $0x18] sm:$0xf]
  %v38 = vld [vmem:[%s1 + $0x1c] sm:$0xf]
  %v39 = vld [vmem:[%s1 + $0x20] sm:$0xf]
  %v40 = vld [vmem:[%s1 + $0x24] sm:$0xf]
  %v41 = vld [vmem:[%s1 + $0x28] sm:$0xf]
  %v42 = vld [vmem:[%s1 + $0x2c] sm:$0xf]
  %v43 = vld [vmem:[%s1 + $0x30] sm:$0xf]
  %v44 = vld [vmem:[%s1 + $0x34] sm:$0xf]
  %v45 = vld [vmem:[%s1 + $0x38] sm:$0xf]
  %v46 = vld [vmem:[%s1 + $0x3c] sm:$0xf]
  %v47 = vld [vmem:[%s1 + $0x40] sm:$0xf]
  %v48 = vld [vmem:[%s1 + $0x44] sm:$0xf]
  %v49 = vld [vmem:[%s1 + $0x48] sm:$0xf]
  %v50 = vld [vmem:[%s1 + $0x4c] sm:$0xf]
  %v51 = vld [vmem:[%s1 + $0x50] sm:$0xf]
  %v52 = vld [vmem:[%s1 + $0x54] sm:$0xf]
  %v53 = vld [vmem:[%s1 + $0x58] sm:$0xf]
  %v54 = vld [vmem:[%s1 + $0x5c] sm:$0xf]
  %v55 = vld [vmem:[%s1 + $0x60] sm:$0xf]
  %v56 = vld [vmem:[%s1 + $0x64] sm:$0xf]
  %v57 = vld [vmem:[%s1 + $0x68] sm:$0xf]
  %v58 = vld [vmem:[%s1 + $0x6c] sm:$0xf]
  %v59 = vld [vmem:[%s1 + $0x70] sm:$0xf]
  %v60 = vld [vmem:[%s1 + $0x74] sm:$0xf]
  %v61 = vld [vmem:[%s1 + $0x78] sm:$0xf]
  %v62 = vld [vmem:[%s1 + $0x7c] sm:$0xf]
  %v63 = vld [vmem:[%s2] sm:$0x1]
  %v65 = vlaneseq
  %v66 = vshrl.u32 %v65, 7
  %v67 = vsub.s32 0, %v66
  %v68 = vrot.slane %v63, %v67
  %v86 = vunpack.c.l.b16 %v15
  %v87 = vunpack.c.h.b16 %v15
  %v88 = vunpack.c.l.b16 %v16
  %v89 = vunpack.c.h.b16 %v16
  %v90 = vunpack.c.l.b16 %v17
  %v91 = vunpack.c.h.b16 %v17
  %v92 = vunpack.c.l.b16 %v18
  %v93 = vunpack.c.h.b16 %v18
  %v94 = vunpack.c.l.b16 %v19
  %v95 = vunpack.c.h.b16 %v19
  %v96 = vunpack.c.l.b16 %v20
  %v97 = vunpack.c.h.b16 %v20
  %v98 = vunpack.c.l.b16 %v21
  %v99 = vunpack.c.h.b16 %v21
  %v100 = vunpack.c.l.b16 %v22
  %v101 = vunpack.c.h.b16 %v22
  %v102 = vunpack.c.l.b16 %v23
  %v103 = vunpack.c.h.b16 %v23
  %v104 = vunpack.c.l.b16 %v24
  %v105 = vunpack.c.h.b16 %v24
  %v106 = vunpack.c.l.b16 %v25
  %v107 = vunpack.c.h.b16 %v25
  %v108 = vunpack.c.l.b16 %v26
  %v109 = vunpack.c.h.b16 %v26
  %v110 = vunpack.c.l.b16 %v27
  %v111 = vunpack.c.h.b16 %v27
  %v112 = vunpack.c.l.b16 %v28
  %v113 = vunpack.c.h.b16 %v28
  %v114 = vunpack.c.l.b16 %v29
  %v115 = vunpack.c.h.b16 %v29
  %v116 = vunpack.c.l.b16 %v30
  %v117 = vunpack.c.h.b16 %v30
  %v118 = vpack.c.b16 %v88, %v86
  %v119 = vpack.c.b16 %v89, %v87
  %v120 = vpack.c.b16 %v92, %v90
  %v121 = vpack.c.b16 %v93, %v91
  %v122 = vpack.c.b16 %v96, %v94
  %v123 = vpack.c.b16 %v97, %v95
  %v124 = vpack.c.b16 %v100, %v98
  %v125 = vpack.c.b16 %v101, %v99
  %v126 = vpack.c.b16 %v104, %v102
  %v127 = vpack.c.b16 %v105, %v103
  %v128 = vpack.c.b16 %v108, %v106
  %v129 = vpack.c.b16 %v109, %v107
  %v130 = vpack.c.b16 %v112, %v110
  %v131 = vpack.c.b16 %v113, %v111
  %v132 = vpack.c.b16 %v116, %v114
  %v133 = vpack.c.b16 %v117, %v115
  %v182 = vunpack.c.l.b16 %v31
  %v183 = vunpack.c.l.b16 %v32
  %v184 = vunpack.c.l.b16 %v33
  %v185 = vunpack.c.l.b16 %v34
  %v186 = vunpack.c.l.b16 %v35
  %v187 = vunpack.c.l.b16 %v36
  %v188 = vunpack.c.l.b16 %v37
  %v189 = vunpack.c.l.b16 %v38
  %v190 = vunpack.c.l.b16 %v39
  %v191 = vunpack.c.l.b16 %v40
  %v192 = vunpack.c.l.b16 %v41
  %v193 = vunpack.c.l.b16 %v42
  %v194 = vunpack.c.l.b16 %v43
  %v195 = vunpack.c.l.b16 %v44
  %v196 = vunpack.c.l.b16 %v45
  %v197 = vunpack.c.l.b16 %v46
  %v198 = vunpack.c.l.b16 %v47
  %v199 = vunpack.c.l.b16 %v48
  %v200 = vunpack.c.l.b16 %v49
  %v201 = vunpack.c.l.b16 %v50
  %v202 = vunpack.c.l.b16 %v51
  %v203 = vunpack.c.l.b16 %v52
  %v204 = vunpack.c.l.b16 %v53
  %v205 = vunpack.c.l.b16 %v54
  %v206 = vunpack.c.l.b16 %v55
  %v207 = vunpack.c.l.b16 %v56
  %v208 = vunpack.c.l.b16 %v57
  %v209 = vunpack.c.l.b16 %v58
  %v210 = vunpack.c.l.b16 %v59
  %v211 = vunpack.c.l.b16 %v60
  %v212 = vunpack.c.l.b16 %v61
  %v213 = vunpack.c.l.b16 %v62
  %v214 = vpack.c.b16 %v183, %v182
  %v215 = vpack.c.b16 %v185, %v184
  %v216 = vpack.c.b16 %v187, %v186
  %v217 = vpack.c.b16 %v189, %v188
  %v218 = vpack.c.b16 %v191, %v190
  %v219 = vpack.c.b16 %v193, %v192
  %v220 = vpack.c.b16 %v195, %v194
  %v221 = vpack.c.b16 %v197, %v196
  %v222 = vpack.c.b16 %v199, %v198
  %v223 = vpack.c.b16 %v201, %v200
  %v224 = vpack.c.b16 %v203, %v202
  %v225 = vpack.c.b16 %v205, %v204
  %v226 = vpack.c.b16 %v207, %v206
  %v227 = vpack.c.b16 %v209, %v208
  %v228 = vpack.c.b16 %v211, %v210
  %v229 = vpack.c.b16 %v213, %v212
  %246 = vmatprep.subr.bf16.mxu0 0
  %247 = vmatpush1.bf16.msra.mxu0 %v221
  %248 = vmatprep.subr.bf16.mxu0 0
  %249 = vmatpush1.bf16.msra.mxu0 %v220
  %250 = vmatprep.subr.bf16.mxu0 0
  %251 = vmatpush1.bf16.msra.mxu0 %v219
  %252 = vmatprep.subr.bf16.mxu0 0
  %253 = vmatpush1.bf16.msra.mxu0 %v218
  %254 = vmatprep.subr.bf16.mxu0 0
  %255 = vmatpush1.bf16.msra.mxu0 %v217
  %256 = vmatprep.subr.bf16.mxu0 0
  %257 = vmatpush1.bf16.msra.mxu0 %v216
  %258 = vmatprep.subr.bf16.mxu0 0
  %259 = vmatpush1.bf16.msra.mxu0 %v215
  %260 = vmatprep.subr.bf16.mxu0 0
  %261 = vmatpush1.bf16.msra.mxu0 %v214
  %262 = vmatprep.subr.bf16.mxu0 0
  %263 = vmatpush2.bf16.msra.mxu0 %v229
  %264 = vmatprep.subr.bf16.mxu0 0
  %265 = vmatpush2.bf16.msra.mxu0 %v228
  %266 = vmatprep.subr.bf16.mxu0 0
  %267 = vmatpush2.bf16.msra.mxu0 %v227
  %268 = vmatprep.subr.bf16.mxu0 0
  %269 = vmatpush2.bf16.msra.mxu0 %v226
  %270 = vmatprep.subr.bf16.mxu0 0
  %271 = vmatpush2.bf16.msra.mxu0 %v225
  %272 = vmatprep.subr.bf16.mxu0 0
  %273 = vmatpush2.bf16.msra.mxu0 %v224
  %274 = vmatprep.subr.bf16.mxu0 0
  %275 = vmatpush2.bf16.msra.mxu0 %v223
  %276 = vmatprep.subr.bf16.mxu0 0
  %277 = vmatpush2.bf16.msra.mxu0 %v222
  %278 = vmatprep.mubr.bf16.mxu0 %v119
  %279 = vmatmul.mubr.bf16.gmra.mxu0 %v118
  %v280 = vpop.f32.mrf.mxu0
  %v281 = vadd.f32 %v68, %v280
  %v282 = vpop.f32.mrf.mxu0
  %v283 = vpop.f32.mrf.mxu0
  %v284 = vadd.f32 %v68, %v283
  %v285 = vpop.f32.mrf.mxu0
  %286 = vmatprep.mubr.bf16.mxu0 %v121
  %287 = vmatmul.mubr.bf16.gmra.mxu0 %v120
  %v288 = vpop.f32.mrf.mxu0
  %v289 = vadd.f32 %v68, %v288
  %v290 = vpop.f32.mrf.mxu0
  %v291 = vpop.f32.mrf.mxu0
  %v292 = vadd.f32 %v68, %v291
  %v293 = vpop.f32.mrf.mxu0
  %294 = vmatprep.mubr.bf16.mxu0 %v123
  %295 = vmatmul.mubr.bf16.gmra.mxu0 %v122
  %v296 = vpop.f32.mrf.mxu0
  %v297 = vadd.f32 %v68, %v296
  %v298 = vpop.f32.mrf.mxu0
  %v299 = vpop.f32.mrf.mxu0
  %v300 = vadd.f32 %v68, %v299
  %v301 = vpop.f32.mrf.mxu0
  %302 = vmatprep.mubr.bf16.mxu0 %v125
  %303 = vmatmul.mubr.bf16.gmra.mxu0 %v124
  %v304 = vpop.f32.mrf.mxu0
  %v305 = vadd.f32 %v68, %v304
  %v306 = vpop.f32.mrf.mxu0
  %v307 = vpop.f32.mrf.mxu0
  %v308 = vadd.f32 %v68, %v307
  %v309 = vpop.f32.mrf.mxu0
  %310 = vmatprep.mubr.bf16.mxu0 %v127
  %311 = vmatmul.mubr.bf16.gmra.mxu0 %v126
  %v312 = vpop.f32.mrf.mxu0
  %v313 = vadd.f32 %v68, %v312
  %v314 = vpop.f32.mrf.mxu0
  %v315 = vpop.f32.mrf.mxu0
  %v316 = vadd.f32 %v68, %v315
  %v317 = vpop.f32.mrf.mxu0
  %318 = vmatprep.mubr.bf16.mxu0 %v129
  %319 = vmatmul.mubr.bf16.gmra.mxu0 %v128
  %v320 = vpop.f32.mrf.mxu0
  %v321 = vadd.f32 %v68, %v320
  %v322 = vpop.f32.mrf.mxu0
  %v323 = vpop.f32.mrf.mxu0
  %v324 = vadd.f32 %v68, %v323
  %v325 = vpop.f32.mrf.mxu0
  %326 = vmatprep.mubr.bf16.mxu0 %v131
  %327 = vmatmul.mubr.bf16.gmra.mxu0 %v130
  %v328 = vpop.f32.mrf.mxu0
  %v329 = vadd.f32 %v68, %v328
  %v330 = vpop.f32.mrf.mxu0
  %v331 = vpop.f32.mrf.mxu0
  %v332 = vadd.f32 %v68, %v331
  %v333 = vpop.f32.mrf.mxu0
  %334 = vmatprep.mubr.bf16.mxu0 %v133
  %335 = vmatmul.mubr.bf16.gmra.mxu0 %v132
  %v336 = vpop.f32.mrf.mxu0
  %v337 = vadd.f32 %v68, %v336
  %v338 = vpop.f32.mrf.mxu0
  %v339 = vpop.f32.mrf.mxu0
  %v340 = vadd.f32 %v68, %v339
  %v341 = vpop.f32.mrf.mxu0
  %342 = vdwg.mxu0
  %v343 = vmax.f32 %v281, 0.0
  %v344 = vmax.f32 %v284, 0.0
  %v345 = vmax.f32 %v289, 0.0
  %v346 = vmax.f32 %v292, 0.0
  %v347 = vmax.f32 %v297, 0.0
  %v348 = vmax.f32 %v300, 0.0
  %v349 = vmax.f32 %v305, 0.0
  %v350 = vmax.f32 %v308, 0.0
  %v351 = vmax.f32 %v313, 0.0
  %v352 = vmax.f32 %v316, 0.0
  %v353 = vmax.f32 %v321, 0.0
  %v354 = vmax.f32 %v324, 0.0
  %v355 = vmax.f32 %v329, 0.0
  %v356 = vmax.f32 %v332, 0.0
  %v357 = vmax.f32 %v337, 0.0
  %v358 = vmax.f32 %v340, 0.0
  %v359 = vpack.c.bf16 %v344, %v343
  %v360 = vpack.c.bf16 %v346, %v345
  %v361 = vpack.c.bf16 %v348, %v347
  %v362 = vpack.c.bf16 %v350, %v349
  %v363 = vpack.c.bf16 %v352, %v351
  %v364 = vpack.c.bf16 %v354, %v353
  %v365 = vpack.c.bf16 %v356, %v355
  %v366 = vpack.c.bf16 %v358, %v357
  %v375 = vunpack.c.l.b16 %v359
  %v376 = vunpack.c.h.b16 %v359
  %v377 = vunpack.c.l.b16 %v360
  %v378 = vunpack.c.h.b16 %v360
  %v379 = vunpack.c.l.b16 %v361
  %v380 = vunpack.c.h.b16 %v361
  %v381 = vunpack.c.l.b16 %v362
  %v382 = vunpack.c.h.b16 %v362
  %v383 = vunpack.c.l.b16 %v363
  %v384 = vunpack.c.h.b16 %v363
  %v385 = vunpack.c.l.b16 %v364
  %v386 = vunpack.c.h.b16 %v364
  %v387 = vunpack.c.l.b16 %v365
  %v388 = vunpack.c.h.b16 %v365
  %v389 = vunpack.c.l.b16 %v366
  %v390 = vunpack.c.h.b16 %v366
  %v391 = vpack.c.b16 %v375, %v375
  %v392 = vpack.c.b16 %v376, %v376
  %v393 = vpack.c.b16 %v377, %v377
  %v394 = vpack.c.b16 %v378, %v378
  %v395 = vpack.c.b16 %v379, %v379
  %v396 = vpack.c.b16 %v380, %v380
  %v397 = vpack.c.b16 %v381, %v381
  %v398 = vpack.c.b16 %v382, %v382
  %v399 = vpack.c.b16 %v383, %v383
  %v400 = vpack.c.b16 %v384, %v384
  %v401 = vpack.c.b16 %v385, %v385
  %v402 = vpack.c.b16 %v386, %v386
  %v403 = vpack.c.b16 %v387, %v387
  %v404 = vpack.c.b16 %v388, %v388
  %v405 = vpack.c.b16 %v389, %v389
  %v406 = vpack.c.b16 %v390, %v390
  %423 = vst [vmem:[%s3] sm:$0xf] %v391
  %424 = vst [vmem:[%s3 + $0x4] sm:$0xf] %v392
  %425 = vst [vmem:[%s3 + $0x8] sm:$0xf] %v393
  %426 = vst [vmem:[%s3 + $0xc] sm:$0xf] %v394
  %427 = vst [vmem:[%s3 + $0x10] sm:$0xf] %v395
  %428 = vst [vmem:[%s3 + $0x14] sm:$0xf] %v396
  %429 = vst [vmem:[%s3 + $0x18] sm:$0xf] %v397
  %430 = vst [vmem:[%s3 + $0x1c] sm:$0xf] %v398
  %431 = vst [vmem:[%s3 + $0x20] sm:$0xf] %v399
  %432 = vst [vmem:[%s3 + $0x24] sm:$0xf] %v400
  %433 = vst [vmem:[%s3 + $0x28] sm:$0xf] %v401
  %434 = vst [vmem:[%s3 + $0x2c] sm:$0xf] %v402
  %435 = vst [vmem:[%s3 + $0x30] sm:$0xf] %v403
  %436 = vst [vmem:[%s3 + $0x34] sm:$0xf] %v404
  %437 = vst [vmem:[%s3 + $0x38] sm:$0xf] %v405
  %438 = vst [vmem:[%s3 + $0x3c] sm:$0xf] %v406
  // Predicated region
  $region14: #{forward.7} parent=0 // pred_check
    _
  $region15: #{forward.7} parent=0 // pred_check_branch
    %440 = sbr.rel (0) target = $region17
  $region16: #{forward.7} parent=0 // pred_region
    _
  $region17: #{forward.7} parent=0 // pred_fallthru
    _
  // Predicated region
  $region18: #{forward.7} parent=0 // pred_check
    _
  $region19: #{forward.7} parent=0 // pred_check_branch
    %442 = sbr.rel (0) target = $region21
  $region20: #{forward.7} parent=0 // pred_region
    _
  $region21: #{forward.7} parent=0 // pred_fallthru
    _

// kernel: forward.8
$region0: #{forward.8}
  #allocation0 [shape = 'u32[]', space=smem, size = 0x4, offset = 0x4, fixed_abs, tag = 'smem constant byte address 0x4 - core index']
  #allocation1 [shape = 'u32[144,128]{1,0:T(1,128)}', space=vmem, size = 0x12000, scoped, tag = 'internal scratch']
  %s0 = inlined_call_operand.vmem [shape: bf16[32,384], index: 0, kind: input, shape index: {}]
  %s1 = inlined_call_operand.vmem [shape: bf16[384,128], index: 1, kind: input, shape index: {}]
  %s2 = inlined_call_operand.vmem [shape: f32[1,128], index: 2, kind: input, shape index: {}]
  %s3 = inlined_call_operand.vmem [shape: bf16[32,128], index: 3, kind: output, shape index: {}]
  %s4 = sld [smem:[#allocation0]]
  $region22: #{forward.8} parent=0
    _
  %s6 = ssub.s32 1, %s4
  %s7 = scalar_select 0, %s6, %s4
  // Predicated region
  $region2: #{forward.8} parent=0 // pred_check
    _
  $region3: #{forward.8} parent=0 // pred_check_branch
    %9 = sbr.rel (0) target = $region5
  $region4: #{forward.8} parent=0 // pred_region
    _
  $region5: #{forward.8} parent=0 // pred_fallthru
    _
  // Predicated region
  $region6: #{forward.8} parent=0 // pred_check
    _
  $region7: #{forward.8} parent=0 // pred_check_branch
    %11 = sbr.rel (0) target = $region9
  $region8: #{forward.8} parent=0 // pred_region
    _
  $region9: #{forward.8} parent=0 // pred_fallthru
    _
  // Predicated region
  $region10: #{forward.8} parent=0 // pred_check
    _
  $region11: #{forward.8} parent=0 // pred_check_branch
    %13 = sbr.rel (0) target = $region13
  $region12: #{forward.8} parent=0 // pred_region
    _
  $region13: #{forward.8} parent=0 // pred_fallthru
    _
  %v15 = vld [vmem:[%s0] sm:$0xff]
  %v16 = vld [vmem:[%s0 + $0x8] sm:$0xf]
  %v17 = vld [vmem:[%s0 + $0xc] sm:$0xff]
  %v18 = vld [vmem:[%s0 + $0x14] sm:$0xf]
  %v19 = vld [vmem:[%s0 + $0x18] sm:$0xff]
  %v20 = vld [vmem:[%s0 + $0x20] sm:$0xf]
  %v21 = vld [vmem:[%s0 + $0x24] sm:$0xff]
  %v22 = vld [vmem:[%s0 + $0x2c] sm:$0xf]
  %v23 = vld [vmem:[%s1] sm:$0xf]
  %v24 = vld [vmem:[%s1 + $0x4] sm:$0xf]
  %v25 = vld [vmem:[%s1 + $0x8] sm:$0xf]
  %v26 = vld [vmem:[%s1 + $0xc] sm:$0xf]
  %v27 = vld [vmem:[%s1 + $0x10] sm:$0xf]
  %v28 = vld [vmem:[%s1 + $0x14] sm:$0xf]
  %v29 = vld [vmem:[%s1 + $0x18] sm:$0xf]
  %v30 = vld [vmem:[%s1 + $0x1c] sm:$0xf]
  %v31 = vld [vmem:[%s1 + $0x20] sm:$0xf]
  %v32 = vld [vmem:[%s1 + $0x24] sm:$0xf]
  %v33 = vld [vmem:[%s1 + $0x28] sm:$0xf]
  %v34 = vld [vmem:[%s1 + $0x2c] sm:$0xf]
  %v35 = vld [vmem:[%s1 + $0x30] sm:$0xf]
  %v36 = vld [vmem:[%s1 + $0x34] sm:$0xf]
  %v37 = vld [vmem:[%s1 + $0x38] sm:$0xf]
  %v38 = vld [vmem:[%s1 + $0x3c] sm:$0xf]
  %v39 = vld [vmem:[%s1 + $0x40] sm:$0xf]
  %v40 = vld [vmem:[%s1 + $0x44] sm:$0xf]
  %v41 = vld [vmem:[%s1 + $0x48] sm:$0xf]
  %v42 = vld [vmem:[%s1 + $0x4c] sm:$0xf]
  %v43 = vld [vmem:[%s1 + $0x50] sm:$0xf]
  %v44 = vld [vmem:[%s1 + $0x54] sm:$0xf]
  %v45 = vld [vmem:[%s1 + $0x58] sm:$0xf]
  %v46 = vld [vmem:[%s1 + $0x5c] sm:$0xf]
  %v47 = vld [vmem:[%s1 + $0x60] sm:$0xf]
  %v48 = vld [vmem:[%s1 + $0x64] sm:$0xf]
  %v49 = vld [vmem:[%s1 + $0x68] sm:$0xf]
  %v50 = vld [vmem:[%s1 + $0x6c] sm:$0xf]
  %v51 = vld [vmem:[%s1 + $0x70] sm:$0xf]
  %v52 = vld [vmem:[%s1 + $0x74] sm:$0xf]
  %v53 = vld [vmem:[%s1 + $0x78] sm:$0xf]
  %v54 = vld [vmem:[%s1 + $0x7c] sm:$0xf]
  %v55 = vld [vmem:[%s1 + $0x80] sm:$0xf]
  %v56 = vld [vmem:[%s1 + $0x84] sm:$0xf]
  %v57 = vld [vmem:[%s1 + $0x88] sm:$0xf]
  %v58 = vld [vmem:[%s1 + $0x8c] sm:$0xf]
  %v59 = vld [vmem:[%s1 + $0x90] sm:$0xf]
  %v60 = vld [vmem:[%s1 + $0x94] sm:$0xf]
  %v61 = vld [vmem:[%s1 + $0x98] sm:$0xf]
  %v62 = vld [vmem:[%s1 + $0x9c] sm:$0xf]
  %v63 = vld [vmem:[%s1 + $0xa0] sm:$0xf]
  %v64 = vld [vmem:[%s1 + $0xa4] sm:$0xf]
  %v65 = vld [vmem:[%s1 + $0xa8] sm:$0xf]
  %v66 = vld [vmem:[%s1 + $0xac] sm:$0xf]
  %v67 = vld [vmem:[%s1 + $0xb0] sm:$0xf]
  %v68 = vld [vmem:[%s1 + $0xb4] sm:$0xf]
  %v69 = vld [vmem:[%s1 + $0xb8] sm:$0xf]
  %v70 = vld [vmem:[%s1 + $0xbc] sm:$0xf]
  %v71 = vld [vmem:[%s2] sm:$0x1]
  %v73 = vlaneseq
  %v74 = vshrl.u32 %v73, 7
  %v75 = vsub.s32 0, %v74
  %v76 = vrot.slane %v71, %v75
  %v86 = vunpack.c.l.b16 %v15
  %v87 = vunpack.c.h.b16 %v15
  %v88 = vunpack.c.l.b16 %v16
  %v89 = vunpack.c.l.b16 %v17
  %v90 = vunpack.c.h.b16 %v17
  %v91 = vunpack.c.l.b16 %v18
  %v92 = vunpack.c.l.b16 %v19
  %v93 = vunpack.c.h.b16 %v19
  %v94 = vunpack.c.l.b16 %v20
  %v95 = vunpack.c.l.b16 %v21
  %v96 = vunpack.c.h.b16 %v21
  %v97 = vunpack.c.l.b16 %v22
  %v98 = vpack.c.b16 %v89, %v86
  %v99 = vpack.c.b16 %v90, %v87
  %v100 = vpack.c.b16 %v91, %v88
  %v101 = vpack.c.b16 %v95, %v92
  %v102 = vpack.c.b16 %v96, %v93
  %v103 = vpack.c.b16 %v97, %v94
  %v158 = vunpack.c.l.b16 %v23
  %v159 = vunpack.c.l.b16 %v24
  %v160 = vunpack.c.l.b16 %v25
  %v161 = vunpack.c.l.b16 %v26
  %v162 = vunpack.c.l.b16 %v27
  %v163 = vunpack.c.l.b16 %v28
  %v164 = vunpack.c.l.b16 %v29
  %v165 = vunpack.c.l.b16 %v30
  %v166 = vunpack.c.l.b16 %v31
  %v167 = vunpack.c.l.b16 %v32
  %v168 = vunpack.c.l.b16 %v33
  %v169 = vunpack.c.l.b16 %v34
  %v170 = vunpack.c.l.b16 %v35
  %v171 = vunpack.c.l.b16 %v36
  %v172 = vunpack.c.l.b16 %v37
  %v173 = vunpack.c.l.b16 %v38
  %v174 = vunpack.c.l.b16 %v39
  %v175 = vunpack.c.l.b16 %v40
  %v176 = vunpack.c.l.b16 %v41
  %v177 = vunpack.c.l.b16 %v42
  %v178 = vunpack.c.l.b16 %v43
  %v179 = vunpack.c.l.b16 %v44
  %v180 = vunpack.c.l.b16 %v45
  %v181 = vunpack.c.l.b16 %v46
  %v182 = vunpack.c.l.b16 %v47
  %v183 = vunpack.c.l.b16 %v48
  %v184 = vunpack.c.l.b16 %v49
  %v185 = vunpack.c.l.b16 %v50
  %v186 = vunpack.c.l.b16 %v51
  %v187 = vunpack.c.l.b16 %v52
  %v188 = vunpack.c.l.b16 %v53
  %v189 = vunpack.c.l.b16 %v54
  %v190 = vunpack.c.l.b16 %v55
  %v191 = vunpack.c.l.b16 %v56
  %v192 = vunpack.c.l.b16 %v57
  %v193 = vunpack.c.l.b16 %v58
  %v194 = vunpack.c.l.b16 %v59
  %v195 = vunpack.c.l.b16 %v60
  %v196 = vunpack.c.l.b16 %v61
  %v197 = vunpack.c.l.b16 %v62
  %v198 = vunpack.c.l.b16 %v63
  %v199 = vunpack.c.l.b16 %v64
  %v200 = vunpack.c.l.b16 %v65
  %v201 = vunpack.c.l.b16 %v66
  %v202 = vunpack.c.l.b16 %v67
  %v203 = vunpack.c.l.b16 %v68
  %v204 = vunpack.c.l.b16 %v69
  %v205 = vunpack.c.l.b16 %v70
  %v206 = vpack.c.b16 %v159, %v158
  %v207 = vpack.c.b16 %v161, %v160
  %v208 = vpack.c.b16 %v163, %v162
  %v209 = vpack.c.b16 %v165, %v164
  %v210 = vpack.c.b16 %v167, %v166
  %v211 = vpack.c.b16 %v169, %v168
  %v212 = vpack.c.b16 %v171, %v170
  %v213 = vpack.c.b16 %v173, %v172
  %v214 = vpack.c.b16 %v175, %v174
  %v215 = vpack.c.b16 %v177, %v176
  %v216 = vpack.c.b16 %v179, %v178
  %v217 = vpack.c.b16 %v181, %v180
  %v218 = vpack.c.b16 %v183, %v182
  %v219 = vpack.c.b16 %v185, %v184
  %v220 = vpack.c.b16 %v187, %v186
  %v221 = vpack.c.b16 %v189, %v188
  %v222 = vpack.c.b16 %v191, %v190
  %v223 = vpack.c.b16 %v193, %v192
  %v224 = vpack.c.b16 %v195, %v194
  %v225 = vpack.c.b16 %v197, %v196
  %v226 = vpack.c.b16 %v199, %v198
  %v227 = vpack.c.b16 %v201, %v200
  %v228 = vpack.c.b16 %v203, %v202
  %v229 = vpack.c.b16 %v205, %v204
  %254 = vmatprep.subr.bf16.mxu0 0
  %255 = vmatpush1.bf16.msra.mxu0 %v213
  %256 = vmatprep.subr.bf16.mxu0 0
  %257 = vmatpush1.bf16.msra.mxu0 %v212
  %258 = vmatprep.subr.bf16.mxu0 0
  %259 = vmatpush1.bf16.msra.mxu0 %v211
  %260 = vmatprep.subr.bf16.mxu0 0
  %261 = vmatpush1.bf16.msra.mxu0 %v210
  %262 = vmatprep.subr.bf16.mxu0 0
  %263 = vmatpush1.bf16.msra.mxu0 %v209
  %264 = vmatprep.subr.bf16.mxu0 0
  %265 = vmatpush1.bf16.msra.mxu0 %v208
  %266 = vmatprep.subr.bf16.mxu0 0
  %267 = vmatpush1.bf16.msra.mxu0 %v207
  %268 = vmatprep.subr.bf16.mxu0 0
  %269 = vmatpush1.bf16.msra.mxu0 %v206
  %270 = vmatprep.subr.bf16.mxu0 0
  %271 = vmatpush2.bf16.msra.mxu0 %v221
  %272 = vmatprep.subr.bf16.mxu0 0
  %273 = vmatpush2.bf16.msra.mxu0 %v220
  %274 = vmatprep.subr.bf16.mxu0 0
  %275 = vmatpush2.bf16.msra.mxu0 %v219
  %276 = vmatprep.subr.bf16.mxu0 0
  %277 = vmatpush2.bf16.msra.mxu0 %v218
  %278 = vmatprep.subr.bf16.mxu0 0
  %279 = vmatpush2.bf16.msra.mxu0 %v217
  %280 = vmatprep.subr.bf16.mxu0 0
  %281 = vmatpush2.bf16.msra.mxu0 %v216
  %282 = vmatprep.subr.bf16.mxu0 0
  %283 = vmatpush2.bf16.msra.mxu0 %v215
  %284 = vmatprep.subr.bf16.mxu0 0
  %285 = vmatpush2.bf16.msra.mxu0 %v214
  %286 = vmatprep.mubr.bf16.mxu0 %v99
  %287 = vmatmul.mubr.bf16.gmra.mxu0 %v98
  %v288 = vpop.f32.mrf.mxu0
  %v289 = vadd.f32 %v76, %v288
  %v290 = vpop.f32.mrf.mxu0
  %v291 = vpop.f32.mrf.mxu0
  %v292 = vadd.f32 %v76, %v291
  %v293 = vpop.f32.mrf.mxu0
  %294 = vmatprep.mubr.bf16.mxu0 %v102
  %295 = vmatmul.mubr.bf16.gmra.mxu0 %v101
  %v296 = vpop.f32.mrf.mxu0
  %v297 = vadd.f32 %v76, %v296
  %v298 = vpop.f32.mrf.mxu0
  %v299 = vpop.f32.mrf.mxu0
  %v300 = vadd.f32 %v76, %v299
  %v301 = vpop.f32.mrf.mxu0
  %302 = vdwg.mxu0
  %303 = vmatprep.subr.bf16.mxu0 0
  %304 = vmatpush1.bf16.msra.mxu0 %v229
  %305 = vmatprep.subr.bf16.mxu0 0
  %306 = vmatpush1.bf16.msra.mxu0 %v228
  %307 = vmatprep.subr.bf16.mxu0 0
  %308 = vmatpush1.bf16.msra.mxu0 %v227
  %309 = vmatprep.subr.bf16.mxu0 0
  %310 = vmatpush1.bf16.msra.mxu0 %v226
  %311 = vmatprep.subr.bf16.mxu0 0
  %312 = vmatpush1.bf16.msra.mxu0 %v225
  %313 = vmatprep.subr.bf16.mxu0 0
  %314 = vmatpush1.bf16.msra.mxu0 %v224
  %315 = vmatprep.subr.bf16.mxu0 0
  %316 = vmatpush1.bf16.msra.mxu0 %v223
  %317 = vmatprep.subr.bf16.mxu0 0
  %318 = vmatpush1.bf16.msra.mxu0 %v222
  %319 = vmatprep.subr.bf16.mxu0 0
  %320 = vmatpush2.bf16.msra.mxu0 0
  %321 = vmatprep.subr.bf16.mxu0 0
  %322 = vmatpush2.bf16.msra.mxu0 0
  %323 = vmatprep.subr.bf16.mxu0 0
  %324 = vmatpush2.bf16.msra.mxu0 0
  %325 = vmatprep.subr.bf16.mxu0 0
  %326 = vmatpush2.bf16.msra.mxu0 0
  %327 = vmatprep.subr.bf16.mxu0 0
  %328 = vmatpush2.bf16.msra.mxu0 0
  %329 = vmatprep.subr.bf16.mxu0 0
  %330 = vmatpush2.bf16.msra.mxu0 0
  %331 = vmatprep.subr.bf16.mxu0 0
  %332 = vmatpush2.bf16.msra.mxu0 0
  %333 = vmatprep.subr.bf16.mxu0 0
  %334 = vmatpush2.bf16.msra.mxu0 0
  %335 = vmatprep.mubr.bf16.mxu0 0
  %336 = vmatmul.mubr.bf16.gmra.mxu0 %v100
  %v337 = vpop.f32.mrf.mxu0
  %v338 = vadd.f32 %v289, %v337
  %v339 = vpop.f32.mrf.mxu0
  %v340 = vpop.f32.mrf.mxu0
  %v341 = vadd.f32 %v292, %v340
  %v342 = vpop.f32.mrf.mxu0
  %343 = vmatprep.mubr.bf16.mxu0 0
  %344 = vmatmul.mubr.bf16.gmra.mxu0 %v103
  %v345 = vpop.f32.mrf.mxu0
  %v346 = vadd.f32 %v297, %v345
  %v347 = vpop.f32.mrf.mxu0
  %v348 = vpop.f32.mrf.mxu0
  %v349 = vadd.f32 %v300, %v348
  %v350 = vpop.f32.mrf.mxu0
  %351 = vdwg.mxu0
  %v352 = vmax.f32 %v338, 0.0
  %v353 = vmax.f32 %v341, 0.0
  %v354 = vmax.f32 %v346, 0.0
  %v355 = vmax.f32 %v349, 0.0
  %v356 = vpack.c.bf16 %v353, %v352
  %v357 = vpack.c.bf16 %v355, %v354
  %v360 = vunpack.c.l.b16 %v356
  %v361 = vunpack.c.h.b16 %v356
  %v362 = vunpack.c.l.b16 %v357
  %v363 = vunpack.c.h.b16 %v357
  %v364 = vpack.c.b16 %v360, %v360
  %v365 = vpack.c.b16 %v361, %v361
  %v366 = vpack.c.b16 %v362, %v362
  %v367 = vpack.c.b16 %v363, %v363
  %372 = vst [vmem:[%s3] sm:$0xf] %v364
  %373 = vst [vmem:[%s3 + $0x4] sm:$0xf] %v365
  %374 = vst [vmem:[%s3 + $0x8] sm:$0xf] %v366
  %375 = vst [vmem:[%s3 + $0xc] sm:$0xf] %v367
  // Predicated region
  $region14: #{forward.8} parent=0 // pred_check
    _
  $region15: #{forward.8} parent=0 // pred_check_branch
    %377 = sbr.rel (0) target = $region17
  $region16: #{forward.8} parent=0 // pred_region
    _
  $region17: #{forward.8} parent=0 // pred_fallthru
    _
  // Predicated region
  $region18: #{forward.8} parent=0 // pred_check
    _
  $region19: #{forward.8} parent=0 // pred_check_branch
    %379 = sbr.rel (0) target = $region21
  $region20: #{forward.8} parent=0 // pred_region
    _
  $region21: #{forward.8} parent=0 // pred_fallthru
    _

// kernel: forward.9
$region0: #{forward.9}
  #allocation0 [shape = 'u32[]', space=smem, size = 0x4, offset = 0x4, fixed_abs, tag = 'smem constant byte address 0x4 - core index']
  #allocation1 [shape = 'u32[144,128]{1,0:T(1,128)}', space=vmem, size = 0x12000, scoped, tag = 'internal scratch']
  %s0 = inlined_call_operand.vmem [shape: bf16[8,640], index: 0, kind: input, shape index: {}]
  %s1 = inlined_call_operand.vmem [shape: bf16[640,128], index: 1, kind: input, shape index: {}]
  %s2 = inlined_call_operand.vmem [shape: f32[1,128], index: 2, kind: input, shape index: {}]
  %s3 = inlined_call_operand.vmem [shape: bf16[8,128], index: 3, kind: output, shape index: {}]
  %s4 = sld [smem:[#allocation0]]
  $region22: #{forward.9} parent=0
    _
  %s6 = ssub.s32 1, %s4
  %s7 = scalar_select 0, %s6, %s4
  // Predicated region
  $region2: #{forward.9} parent=0 // pred_check
    _
  $region3: #{forward.9} parent=0 // pred_check_branch
    %9 = sbr.rel (0) target = $region5
  $region4: #{forward.9} parent=0 // pred_region
    _
  $region5: #{forward.9} parent=0 // pred_fallthru
    _
  // Predicated region
  $region6: #{forward.9} parent=0 // pred_check
    _
  $region7: #{forward.9} parent=0 // pred_check_branch
    %11 = sbr.rel (0) target = $region9
  $region8: #{forward.9} parent=0 // pred_region
    _
  $region9: #{forward.9} parent=0 // pred_fallthru
    _
  // Predicated region
  $region10: #{forward.9} parent=0 // pred_check
    _
  $region11: #{forward.9} parent=0 // pred_check_branch
    %13 = sbr.rel (0) target = $region13
  $region12: #{forward.9} parent=0 // pred_region
    _
  $region13: #{forward.9} parent=0 // pred_fallthru
    _
  %v15 = vld [vmem:[%s0] sm:$0xff]
  %v16 = vld [vmem:[%s0 + $0x8] sm:$0xff]
  %v17 = vld [vmem:[%s0 + $0x10] sm:$0xf]
  %v18 = vld [vmem:[%s1] sm:$0xf]
  %v19 = vld [vmem:[%s1 + $0x4] sm:$0xf]
  %v20 = vld [vmem:[%s1 + $0x8] sm:$0xf]
  %v21 = vld [vmem:[%s1 + $0xc] sm:$0xf]
  %v22 = vld [vmem:[%s1 + $0x10] sm:$0xf]
  %v23 = vld [vmem:[%s1 + $0x14] sm:$0xf]
  %v24 = vld [vmem:[%s1 + $0x18] sm:$0xf]
  %v25 = vld [vmem:[%s1 + $0x1c] sm:$0xf]
  %v26 = vld [vmem:[%s1 + $0x20] sm:$0xf]
  %v27 = vld [vmem:[%s1 + $0x24] sm:$0xf]
  %v28 = vld [vmem:[%s1 + $0x28] sm:$0xf]
  %v29 = vld [vmem:[%s1 + $0x2c] sm:$0xf]
  %v30 = vld [vmem:[%s1 + $0x30] sm:$0xf]
  %v31 = vld [vmem:[%s1 + $0x34] sm:$0xf]
  %v32 = vld [vmem:[%s1 + $0x38] sm:$0xf]
  %v33 = vld [vmem:[%s1 + $0x3c] sm:$0xf]
  %v34 = vld [vmem:[%s1 + $0x40] sm:$0xf]
  %v35 = vld [vmem:[%s1 + $0x44] sm:$0xf]
  %v36 = vld [vmem:[%s1 + $0x48] sm:$0xf]
  %v37 = vld [vmem:[%s1 + $0x4c] sm:$0xf]
  %v38 = vld [vmem:[%s1 + $0x50] sm:$0xf]
  %v39 = vld [vmem:[%s1 + $0x54] sm:$0xf]
  %v40 = vld [vmem:[%s1 + $0x58] sm:$0xf]
  %v41 = vld [vmem:[%s1 + $0x5c] sm:$0xf]
  %v42 = vld [vmem:[%s1 + $0x60] sm:$0xf]
  %v43 = vld [vmem:[%s1 + $0x64] sm:$0xf]
  %v44 = vld [vmem:[%s1 + $0x68] sm:$0xf]
  %v45 = vld [vmem:[%s1 + $0x6c] sm:$0xf]
  %v46 = vld [vmem:[%s1 + $0x70] sm:$0xf]
  %v47 = vld [vmem:[%s1 + $0x74] sm:$0xf]
  %v48 = vld [vmem:[%s1 + $0x78] sm:$0xf]
  %v49 = vld [vmem:[%s1 + $0x7c] sm:$0xf]
  %v50 = vld [vmem:[%s1 + $0x80] sm:$0xf]
  %v51 = vld [vmem:[%s1 + $0x84] sm:$0xf]
  %v52 = vld [vmem:[%s1 + $0x88] sm:$0xf]
  %v53 = vld [vmem:[%s1 + $0x8c] sm:$0xf]
  %v54 = vld [vmem:[%s1 + $0x90] sm:$0xf]
  %v55 = vld [vmem:[%s1 + $0x94] sm:$0xf]
  %v56 = vld [vmem:[%s1 + $0x98] sm:$0xf]
  %v57 = vld [vmem:[%s1 + $0x9c] sm:$0xf]
  %v58 = vld [vmem:[%s1 + $0xa0] sm:$0xf]
  %v59 = vld [vmem:[%s1 + $0xa4] sm:$0xf]
  %v60 = vld [vmem:[%s1 + $0xa8] sm:$0xf]
  %v61 = vld [vmem:[%s1 + $0xac] sm:$0xf]
  %v62 = vld [vmem:[%s1 + $0xb0] sm:$0xf]
  %v63 = vld [vmem:[%s1 + $0xb4] sm:$0xf]
  %v64 = vld [vmem:[%s1 + $0xb8] sm:$0xf]
  %v65 = vld [vmem:[%s1 + $0xbc] sm:$0xf]
  %v66 = vld [vmem:[%s1 + $0xc0] sm:$0xf]
  %v67 = vld [vmem:[%s1 + $0xc4] sm:$0xf]
  %v68 = vld [vmem:[%s1 + $0xc8] sm:$0xf]
  %v69 = vld [vmem:[%s1 + $0xcc] sm:$0xf]
  %v70 = vld [vmem:[%s1 + $0xd0] sm:$0xf]
  %v71 = vld [vmem:[%s1 + $0xd4] sm:$0xf]
  %v72 = vld [vmem:[%s1 + $0xd8] sm:$0xf]
  %v73 = vld [vmem:[%s1 + $0xdc] sm:$0xf]
  %v74 = vld [vmem:[%s1 + $0xe0] sm:$0xf]
  %v75 = vld [vmem:[%s1 + $0xe4] sm:$0xf]
  %v76 = vld [vmem:[%s1 + $0xe8] sm:$0xf]
  %v77 = vld [vmem:[%s1 + $0xec] sm:$0xf]
  %v78 = vld [vmem:[%s1 + $0xf0] sm:$0xf]
  %v79 = vld [vmem:[%s1 + $0xf4] sm:$0xf]
  %v80 = vld [vmem:[%s1 + $0xf8] sm:$0xf]
  %v81 = vld [vmem:[%s1 + $0xfc] sm:$0xf]
  %v82 = vld [vmem:[%s1 + $0x100] sm:$0xf]
  %v83 = vld [vmem:[%s1 + $0x104] sm:$0xf]
  %v84 = vld [vmem:[%s1 + $0x108] sm:$0xf]
  %v85 = vld [vmem:[%s1 + $0x10c] sm:$0xf]
  %v86 = vld [vmem:[%s1 + $0x110] sm:$0xf]
  %v87 = vld [vmem:[%s1 + $0x114] sm:$0xf]
  %v88 = vld [vmem:[%s1 + $0x118] sm:$0xf]
  %v89 = vld [vmem:[%s1 + $0x11c] sm:$0xf]
  %v90 = vld [vmem:[%s1 + $0x120] sm:$0xf]
  %v91 = vld [vmem:[%s1 + $0x124] sm:$0xf]
  %v92 = vld [vmem:[%s1 + $0x128] sm:$0xf]
  %v93 = vld [vmem:[%s1 + $0x12c] sm:$0xf]
  %v94 = vld [vmem:[%s1 + $0x130] sm:$0xf]
  %v95 = vld [vmem:[%s1 + $0x134] sm:$0xf]
  %v96 = vld [vmem:[%s1 + $0x138] sm:$0xf]
  %v97 = vld [vmem:[%s1 + $0x13c] sm:$0xf]
  %v98 = vld [vmem:[%s2] sm:$0x1]
  %v100 = vlaneseq
  %v101 = vshrl.u32 %v100, 7
  %v102 = vsub.s32 0, %v101
  %v103 = vrot.slane %v98, %v102
  %v108 = vunpack.c.l.b16 %v15
  %v109 = vunpack.c.h.b16 %v15
  %v110 = vunpack.c.l.b16 %v16
  %v111 = vunpack.c.h.b16 %v16
  %v112 = vunpack.c.l.b16 %v17
  %v113 = vpack.c.b16 %v108, %v108
  %v114 = vpack.c.b16 %v109, %v109
  %v115 = vpack.c.b16 %v110, %v110
  %v116 = vpack.c.b16 %v111, %v111
  %v117 = vpack.c.b16 %v112, %v112
  %v203 = vunpack.c.l.b16 %v18
  %v204 = vunpack.c.l.b16 %v19
  %v205 = vunpack.c.l.b16 %v20
  %v206 = vunpack.c.l.b16 %v21
  %v207 = vunpack.c.l.b16 %v22
  %v208 = vunpack.c.l.b16 %v23
  %v209 = vunpack.c.l.b16 %v24
  %v210 = vunpack.c.l.b16 %v25
  %v211 = vunpack.c.l.b16 %v26
  %v212 = vunpack.c.l.b16 %v27
  %v213 = vunpack.c.l.b16 %v28
  %v214 = vunpack.c.l.b16 %v29
  %v215 = vunpack.c.l.b16 %v30
  %v216 = vunpack.c.l.b16 %v31
  %v217 = vunpack.c.l.b16 %v32
  %v218 = vunpack.c.l.b16 %v33
  %v219 = vunpack.c.l.b16 %v34
  %v220 = vunpack.c.l.b16 %v35
  %v221 = vunpack.c.l.b16 %v36
  %v222 = vunpack.c.l.b16 %v37
  %v223 = vunpack.c.l.b16 %v38
  %v224 = vunpack.c.l.b16 %v39
  %v225 = vunpack.c.l.b16 %v40
  %v226 = vunpack.c.l.b16 %v41
  %v227 = vunpack.c.l.b16 %v42
  %v228 = vunpack.c.l.b16 %v43
  %v229 = vunpack.c.l.b16 %v44
  %v230 = vunpack.c.l.b16 %v45
  %v231 = vunpack.c.l.b16 %v46
  %v232 = vunpack.c.l.b16 %v47
  %v233 = vunpack.c.l.b16 %v48
  %v234 = vunpack.c.l.b16 %v49
  %v235 = vunpack.c.l.b16 %v50
  %v236 = vunpack.c.l.b16 %v51
  %v237 = vunpack.c.l.b16 %v52
  %v238 = vunpack.c.l.b16 %v53
  %v239 = vunpack.c.l.b16 %v54
  %v240 = vunpack.c.l.b16 %v55
  %v241 = vunpack.c.l.b16 %v56
  %v242 = vunpack.c.l.b16 %v57
  %v243 = vunpack.c.l.b16 %v58
  %v244 = vunpack.c.l.b16 %v59
  %v245 = vunpack.c.l.b16 %v60
  %v246 = vunpack.c.l.b16 %v61
  %v247 = vunpack.c.l.b16 %v62
  %v248 = vunpack.c.l.b16 %v63
  %v249 = vunpack.c.l.b16 %v64
  %v250 = vunpack.c.l.b16 %v65
  %v251 = vunpack.c.l.b16 %v66
  %v252 = vunpack.c.l.b16 %v67
  %v253 = vunpack.c.l.b16 %v68
  %v254 = vunpack.c.l.b16 %v69
  %v255 = vunpack.c.l.b16 %v70
  %v256 = vunpack.c.l.b16 %v71
  %v257 = vunpack.c.l.b16 %v72
  %v258 = vunpack.c.l.b16 %v73
  %v259 = vunpack.c.l.b16 %v74
  %v260 = vunpack.c.l.b16 %v75
  %v261 = vunpack.c.l.b16 %v76
  %v262 = vunpack.c.l.b16 %v77
  %v263 = vunpack.c.l.b16 %v78
  %v264 = vunpack.c.l.b16 %v79
  %v265 = vunpack.c.l.b16 %v80
  %v266 = vunpack.c.l.b16 %v81
  %v267 = vunpack.c.l.b16 %v82
  %v268 = vunpack.c.l.b16 %v83
  %v269 = vunpack.c.l.b16 %v84
  %v270 = vunpack.c.l.b16 %v85
  %v271 = vunpack.c.l.b16 %v86
  %v272 = vunpack.c.l.b16 %v87
  %v273 = vunpack.c.l.b16 %v88
  %v274 = vunpack.c.l.b16 %v89
  %v275 = vunpack.c.l.b16 %v90
  %v276 = vunpack.c.l.b16 %v91
  %v277 = vunpack.c.l.b16 %v92
  %v278 = vunpack.c.l.b16 %v93
  %v279 = vunpack.c.l.b16 %v94
  %v280 = vunpack.c.l.b16 %v95
  %v281 = vunpack.c.l.b16 %v96
  %v282 = vunpack.c.l.b16 %v97
  %v283 = vpack.c.b16 %v204, %v203
  %v284 = vpack.c.b16 %v206, %v205
  %v285 = vpack.c.b16 %v208, %v207
  %v286 = vpack.c.b16 %v210, %v209
  %v287 = vpack.c.b16 %v212, %v211
  %v288 = vpack.c.b16 %v214, %v213
  %v289 = vpack.c.b16 %v216, %v215
  %v290 = vpack.c.b16 %v218, %v217
  %v291 = vpack.c.b16 %v220, %v219
  %v292 = vpack.c.b16 %v222, %v221
  %v293 = vpack.c.b16 %v224, %v223
  %v294 = vpack.c.b16 %v226, %v225
  %v295 = vpack.c.b16 %v228, %v227
  %v296 = vpack.c.b16 %v230, %v229
  %v297 = vpack.c.b16 %v232, %v231
  %v298 = vpack.c.b16 %v234, %v233
  %v299 = vpack.c.b16 %v236, %v235
  %v300 = vpack.c.b16 %v238, %v237
  %v301 = vpack.c.b16 %v240, %v239
  %v302 = vpack.c.b16 %v242, %v241
  %v303 = vpack.c.b16 %v244, %v243
  %v304 = vpack.c.b16 %v246, %v245
  %v305 = vpack.c.b16 %v248, %v247
  %v306 = vpack.c.b16 %v250, %v249
  %v307 = vpack.c.b16 %v252, %v251
  %v308 = vpack.c.b16 %v254, %v253
  %v309 = vpack.c.b16 %v256, %v255
  %v310 = vpack.c.b16 %v258, %v257
  %v311 = vpack.c.b16 %v260, %v259
  %v312 = vpack.c.b16 %v262, %v261
  %v313 = vpack.c.b16 %v264, %v263
  %v314 = vpack.c.b16 %v266, %v265
  %v315 = vpack.c.b16 %v268, %v267
  %v316 = vpack.c.b16 %v270, %v269
  %v317 = vpack.c.b16 %v272, %v271
  %v318 = vpack.c.b16 %v274, %v273
  %v319 = vpack.c.b16 %v276, %v275
  %v320 = vpack.c.b16 %v278, %v277
  %v321 = vpack.c.b16 %v280, %v279
  %v322 = vpack.c.b16 %v282, %v281
  %363 = vmatprep.subr.bf16.mxu0 0
  %364 = vmatpush1.bf16.msra.mxu0 %v290
  %365 = vmatprep.subr.bf16.mxu0 0
  %366 = vmatpush1.bf16.msra.mxu0 %v289
  %367 = vmatprep.subr.bf16.mxu0 0
  %368 = vmatpush1.bf16.msra.mxu0 %v288
  %369 = vmatprep.subr.bf16.mxu0 0
  %370 = vmatpush1.bf16.msra.mxu0 %v287
  %371 = vmatprep.subr.bf16.mxu0 0
  %372 = vmatpush1.bf16.msra.mxu0 %v286
  %373 = vmatprep.subr.bf16.mxu0 0
  %374 = vmatpush1.bf16.msra.mxu0 %v285
  %375 = vmatprep.subr.bf16.mxu0 0
  %376 = vmatpush1.bf16.msra.mxu0 %v284
  %377 = vmatprep.subr.bf16.mxu0 0
  %378 = vmatpush1.bf16.msra.mxu0 %v283
  %379 = vmatprep.subr.bf16.mxu0 0
  %380 = vmatpush2.bf16.msra.mxu0 %v298
  %381 = vmatprep.subr.bf16.mxu0 0
  %382 = vmatpush2.bf16.msra.mxu0 %v297
  %383 = vmatprep.subr.bf16.mxu0 0
  %384 = vmatpush2.bf16.msra.mxu0 %v296
  %385 = vmatprep.subr.bf16.mxu0 0
  %386 = vmatpush2.bf16.msra.mxu0 %v295
  %387 = vmatprep.subr.bf16.mxu0 0
  %388 = vmatpush2.bf16.msra.mxu0 %v294
  %389 = vmatprep.subr.bf16.mxu0 0
  %390 = vmatpush2.bf16.msra.mxu0 %v293
  %391 = vmatprep.subr.bf16.mxu0 0
  %392 = vmatpush2.bf16.msra.mxu0 %v292
  %393 = vmatprep.subr.bf16.mxu0 0
  %394 = vmatpush2.bf16.msra.mxu0 %v291
  %395 = vmatprep.mubr.bf16.mxu0 %v114
  %396 = vmatmul.mubr.bf16.gmra.mxu0 %v113
  %v397 = vpop.f32.mrf.mxu0
  %v398 = vadd.f32 %v103, %v397
  %v399 = vpop.f32.mrf.mxu0
  %v400 = vpop.f32.mrf.mxu0
  %v401 = vpop.f32.mrf.mxu0
  %402 = vdwg.mxu0
  %403 = vmatprep.subr.bf16.mxu0 0
  %404 = vmatpush1.bf16.msra.mxu0 %v306
  %405 = vmatprep.subr.bf16.mxu0 0
  %406 = vmatpush1.bf16.msra.mxu0 %v305
  %407 = vmatprep.subr.bf16.mxu0 0
  %408 = vmatpush1.bf16.msra.mxu0 %v304
  %409 = vmatprep.subr.bf16.mxu0 0
  %410 = vmatpush1.bf16.msra.mxu0 %v303
  %411 = vmatprep.subr.bf16.mxu0 0
  %412 = vmatpush1.bf16.msra.mxu0 %v302
  %413 = vmatprep.subr.bf16.mxu0 0
  %414 = vmatpush1.bf16.msra.mxu0 %v301
  %415 = vmatprep.subr.bf16.mxu0 0
  %416 = vmatpush1.bf16.msra.mxu0 %v300
  %417 = vmatprep.subr.bf16.mxu0 0
  %418 = vmatpush1.bf16.msra.mxu0 %v299
  %419 = vmatprep.subr.bf16.mxu0 0
  %420 = vmatpush2.bf16.msra.mxu0 %v314
  %421 = vmatprep.subr.bf16.mxu0 0
  %422 = vmatpush2.bf16.msra.mxu0 %v313
  %423 = vmatprep.subr.bf16.mxu0 0
  %424 = vmatpush2.bf16.msra.mxu0 %v312
  %425 = vmatprep.subr.bf16.mxu0 0
  %426 = vmatpush2.bf16.msra.mxu0 %v311
  %427 = vmatprep.subr.bf16.mxu0 0
  %428 = vmatpush2.bf16.msra.mxu0 %v310
  %429 = vmatprep.subr.bf16.mxu0 0
  %430 = vmatpush2.bf16.msra.mxu0 %v309
  %431 = vmatprep.subr.bf16.mxu0 0
  %432 = vmatpush2.bf16.msra.mxu0 %v308
  %433 = vmatprep.subr.bf16.mxu0 0
  %434 = vmatpush2.bf16.msra.mxu0 %v307
  %435 = vmatprep.mubr.bf16.mxu0 %v116
  %436 = vmatmul.mubr.bf16.gmra.mxu0 %v115
  %v437 = vpop.f32.mrf.mxu0
  %v438 = vadd.f32 %v398, %v437
  %v439 = vpop.f32.mrf.mxu0
  %v440 = vpop.f32.mrf.mxu0
  %v441 = vpop.f32.mrf.mxu0
  %442 = vdwg.mxu0
  %443 = vmatprep.subr.bf16.mxu0 0
  %444 = vmatpush1.bf16.msra.mxu0 %v322
  %445 = vmatprep.subr.bf16.mxu0 0
  %446 = vmatpush1.bf16.msra.mxu0 %v321
  %447 = vmatprep.subr.bf16.mxu0 0
  %448 = vmatpush1.bf16.msra.mxu0 %v320
  %449 = vmatprep.subr.bf16.mxu0 0
  %450 = vmatpush1.bf16.msra.mxu0 %v319
  %451 = vmatprep.subr.bf16.mxu0 0
  %452 = vmatpush1.bf16.msra.mxu0 %v318
  %453 = vmatprep.subr.bf16.mxu0 0
  %454 = vmatpush1.bf16.msra.mxu0 %v317
  %455 = vmatprep.subr.bf16.mxu0 0
  %456 = vmatpush1.bf16.msra.mxu0 %v316
  %457 = vmatprep.subr.bf16.mxu0 0
  %458 = vmatpush1.bf16.msra.mxu0 %v315
  %459 = vmatprep.subr.bf16.mxu0 0
  %460 = vmatpush2.bf16.msra.mxu0 0
  %461 = vmatprep.subr.bf16.mxu0 0
  %462 = vmatpush2.bf16.msra.mxu0 0
  %463 = vmatprep.subr.bf16.mxu0 0
  %464 = vmatpush2.bf16.msra.mxu0 0
  %465 = vmatprep.subr.bf16.mxu0 0
  %466 = vmatpush2.bf16.msra.mxu0 0
  %467 = vmatprep.subr.bf16.mxu0 0
  %468 = vmatpush2.bf16.msra.mxu0 0
  %469 = vmatprep.subr.bf16.mxu0 0
  %470 = vmatpush2.bf16.msra.mxu0 0
  %471 = vmatprep.subr.bf16.mxu0 0
  %472 = vmatpush2.bf16.msra.mxu0 0
  %473 = vmatprep.subr.bf16.mxu0 0
  %474 = vmatpush2.bf16.msra.mxu0 0
  %475 = vmatprep.mubr.bf16.mxu0 0
  %476 = vmatmul.mubr.bf16.gmra.mxu0 %v117
  %v477 = vpop.f32.mrf.mxu0
  %v478 = vadd.f32 %v438, %v477
  %v479 = vpop.f32.mrf.mxu0
  %v480 = vpop.f32.mrf.mxu0
  %v481 = vpop.f32.mrf.mxu0
  %482 = vdwg.mxu0
  %v483 = vmax.f32 %v478, 0.0
  %v484 = vpack.c.bf16 %v483, %v483
  %485 = vst [vmem:[%s3] sm:$0xf] %v484
  // Predicated region
  $region14: #{forward.9} parent=0 // pred_check
    _
  $region15: #{forward.9} parent=0 // pred_check_branch
    %487 = sbr.rel (0) target = $region17
  $region16: #{forward.9} parent=0 // pred_region
    _
  $region17: #{forward.9} parent=0 // pred_fallthru
    _
  // Predicated region
  $region18: #{forward.9} parent=0 // pred_check
    _
  $region19: #{forward.9} parent=0 // pred_check_branch
    %489 = sbr.rel (0) target = $region21
  $region20: #{forward.9} parent=0 // pred_region
    _
  $region21: #{forward.9} parent=0 // pred_fallthru
    _

</llo_original>
